<compile_context>
chip_gen: v7x
topology: tpu7x:2x2x1
jax: 0.10.0
libtpu: 0.0.40
codegen_flags: <defaults>
</compile_context>

<pallas_src>
import functools

import jax
import jax.numpy as jnp
from jax import lax
from jax.experimental import pallas as pl
from jax.experimental.pallas import tpu as pltpu


def _iatt_kernel(x_ref, q_ref, wq_ref, wi_ref, w1_ref, w2_ref, b_ref, o_ref,
                 *, mfb_out_dim, mfb_factor_num):
    O = mfb_out_dim
    K = mfb_factor_num
    Bb, S, C = x_ref.shape
    J = wi_ref.shape[1]
    G = w2_ref.shape[1]
    md = w1_ref.dtype                  # matmul operand dtype (weights pre-cast in wrapper)

    x = x_ref[...]                     # [Bb, S, C], channels lane-dense, already matmul dtype
    x2 = x.reshape(Bb * S, C)

    # Packed biases (f32), one row each:
    #   row 0 = Linear1_q_proj.bias (k-major perm), row 1 = Conv_i_proj.bias (k-major perm),
    #   row 2 = Conv1_Iatt.bias, row 3 = Conv2_Iatt.bias
    bq = b_ref[0:1, 0:J]
    bi = b_ref[1:2, 0:J]
    b1 = b_ref[2:3, 0:C]
    b2 = b_ref[3:4, 0:G]

    # ---- Linear1_q_proj -----------------------------------------------------
    q = q_ref[:, 0, :]                                                 # [Bb, Dq]
    q_proj = jnp.dot(q, wq_ref[...],
                     preferred_element_type=jnp.float32) + bq          # [Bb, J]  (f32)

    # ---- Conv_i_proj (1x1 conv == channel matmul over the [Bb*S, C] slab) ---
    i_conv = jnp.dot(x2, wi_ref[...],
                     preferred_element_type=jnp.float32) + bi          # [Bb*S, J] (f32)
    i_conv = i_conv.reshape(Bb, S, J)

    # ---- MFB: fused elementwise multiply + sum-pool over the K factor -------
    # The J axis was pre-permuted to k-major (j' = k*O + o) in the wrapper, so each factor
    # is a contiguous lane slab of width O; accumulate per slab without materializing the
    # full [Bb, S, J] intermediate.
    z = i_conv[:, :, 0:O] * q_proj[:, None, 0:O]
    for k in range(1, K):                                              # K is small & static
        z = z + i_conv[:, :, k * O:(k + 1) * O] * q_proj[:, None, k * O:(k + 1) * O]

    # ---- signed sqrt + per-batch L2 normalization over (S*O) ----------------
    y = jnp.sqrt(jnp.maximum(z, 0.0)) - jnp.sqrt(jnp.maximum(-z, 0.0))
    sq = jnp.sum(jnp.sum(y * y, axis=2, keepdims=True), axis=1, keepdims=True)   # [Bb,1,1]
    # F.normalize(eps=1e-12):  y / max(||y||, 1e-12) == y * rsqrt(max(||y||^2, 1e-24)) (EUP)
    y = y * lax.rsqrt(jnp.maximum(sq, 1e-24))

    # ---- Conv1_Iatt + ReLU, Conv2_Iatt ---------------------------------------
    h = jnp.maximum(
        jnp.dot(y.reshape(Bb * S, O).astype(md), w1_ref[...],
                preferred_element_type=jnp.float32) + b1,
        0.0)                                                           # [Bb*S, C]
    a = jnp.dot(h.astype(md), w2_ref[...],
                preferred_element_type=jnp.float32) + b2               # [Bb*S, G]

    # ---- softmax over S (lane-dense): one small XLU transpose, then exp/sum on lanes
    a = jnp.transpose(a.reshape(Bb, S, G), (0, 2, 1))                  # [Bb, G, S]
    m = jnp.max(a, axis=2, keepdims=True)
    e = jnp.exp(a - m)
    p = e / jnp.sum(e, axis=2, keepdims=True)                          # exact: weights sum to 1

    # ---- attention-weighted pooling: out[b,g,c] = sum_s p[b,g,s] * x[b,s,c] ---
    o_ref[...] = jnp.einsum('bgs,bsc->bgc', p.astype(md), x,
                            preferred_element_type=jnp.float32)        # [Bb, G, C]


def _tensorcores_per_chip():
    """Best-effort TensorCores-per-chip (v7x has 2; v5e/v6e have 1)."""
    try:
        kind = jax.devices()[0].device_kind.lower()
    except Exception:
        return 1
    return 2 if ("v7" in kind or "7x" in kind) else 1


def _pick_block_b(batch, seq, num_cores, target_rows=256):
    """Batches per grid step.

    Single-TC chips: fewest/fattest steps that fill ~target_rows MXU rows (one step if
    possible). Dual-TC chips: keep >= num_cores steps (ideally a multiple of num_cores) so
    both TensorCores get equal shares of the 'parallel' grid axis.
    """
    best, best_score = 1, None
    for cand in range(1, batch + 1):
        if batch % cand:
            continue
        steps = batch // cand
        if num_cores >= 2 and batch >= num_cores and steps < num_cores:
            continue
        parity = 0 if (num_cores == 1 or steps % num_cores == 0) else 1
        rows = cand * seq
        deficit = max(0, target_rows - rows)
        excess = max(0, rows - 4 * target_rows)
        score = (parity, deficit + excess, steps)
        if best_score is None or score < best_score:
            best, best_score = cand, score
    return best


def image_feature_extraction_att(img_feature, qstatt_feature,
                                 wq, bq, wi, bi, w1, b1, w2, b2,
                                 *, mfb_out_dim, mfb_factor_num,
                                 block_b=None, matmul_dtype=jnp.float32):
    """img_feature: [B, C, S]; qstatt_feature: [B, Dq, 1, 1]  ->  [B, G*C] (torch output for B > 1).

    Pass matmul_dtype=jnp.bfloat16 on v6e/v7x for ~2-4x faster MXU passes and half the weight
    DMA bytes (accumulation stays f32); kept opt-in because it changes numerics slightly.
    """
    B, C, S = img_feature.shape
    O, K = mfb_out_dim, mfb_factor_num
    J = O * K
    Dq = wq.shape[1]
    G = w2.shape[0]
    assert wq.shape == (J, Dq) and wi.shape == (J, C)
    assert w1.shape == (C, O) and w2.shape == (G, C)

    # Lane-dense layout: channels on the last (lane) axis everywhere. Operands that only feed
    # the MXU (x, q, all weights) are pre-cast to matmul_dtype HERE, not per grid step.
    x_sc = jnp.transpose(img_feature, (0, 2, 1)).astype(matmul_dtype)     # [B, S, C]
    q3 = qstatt_feature.reshape(B, 1, Dq).astype(matmul_dtype)            # torch.squeeze, kept 3-D

    # Permute JOINT_EMB_SIZE to k-major (new j' = k*O + o  <-  old j = o*K + k) so the
    # in-kernel MFB sum-pool is K contiguous lane slabs.
    perm = jnp.arange(J).reshape(O, K).T.reshape(-1)
    wq_t = jnp.transpose(wq[perm, :], (1, 0)).astype(matmul_dtype)        # [Dq, J']
    wi_t = jnp.transpose(wi[perm, :], (1, 0)).astype(matmul_dtype)        # [C, J']
    w1_t = jnp.transpose(w1, (1, 0)).astype(matmul_dtype)                 # [O, C]
    w2_t = jnp.transpose(w2, (1, 0)).astype(matmul_dtype)                 # [C, G]

    # Pack the four bias vectors (kept f32: they are added to f32 accumulators) into one input.
    bias_w = max(J, C, G)
    b_pack = jnp.zeros((4, bias_w), jnp.float32)
    b_pack = b_pack.at[0, :J].set(bq[perm].astype(jnp.float32))
    b_pack = b_pack.at[1, :J].set(bi[perm].astype(jnp.float32))
    b_pack = b_pack.at[2, :C].set(b1.astype(jnp.float32))
    b_pack = b_pack.at[3, :G].set(b2.astype(jnp.float32))

    num_cores = _tensorcores_per_chip()
    if block_b is None:
        block_b = _pick_block_b(B, S, num_cores)
    assert B % block_b == 0, "block_b must divide the batch"
    grid = (B // block_b,)

    kernel = functools.partial(_iatt_kernel, mfb_out_dim=O, mfb_factor_num=K)

    def build(weight_pipeline_mode):
        wkw = {} if weight_pipeline_mode is None else {"pipeline_mode": weight_pipeline_mode}
        in_specs = [
            pl.BlockSpec((block_b, S, C), lambda b: (b, 0, 0)),           # image features [Bb,S,C]
            pl.BlockSpec((block_b, 1, Dq), lambda b: (b, 0, 0)),          # question features
            pl.BlockSpec((Dq, J), lambda b: (0, 0), **wkw),               # Linear1_q_proj.W^T (perm)
            pl.BlockSpec((C, J), lambda b: (0, 0), **wkw),                # Conv_i_proj.W^T (perm)
            pl.BlockSpec((O, C), lambda b: (0, 0), **wkw),                # Conv1_Iatt.W^T
            pl.BlockSpec((C, G), lambda b: (0, 0), **wkw),                # Conv2_Iatt.W^T
            pl.BlockSpec((4, bias_w), lambda b: (0, 0), **wkw),           # packed biases
        ]
        out_specs = pl.BlockSpec((block_b, G, C), lambda b: (b, 0, 0))
        return pl.pallas_call(
            kernel,
            out_shape=jax.ShapeDtypeStruct((B, G, C), jnp.float32),
            grid_spec=pltpu.PrefetchScalarGridSpec(
                num_scalar_prefetch=0, grid=grid,
                in_specs=in_specs, out_specs=out_specs),
            compiler_params=pltpu.CompilerParams(dimension_semantics=("parallel",)),
        )

    args = (x_sc, q3, wq_t, wi_t, w1_t, w2_t, b_pack)
    # Weights/biases have a constant block index across the grid -> single-buffer them to
    # halve their VMEM residency; fall back to default double-buffering if this jax version
    # rejects Buffered(1).
    try:
        out = build(pl.Buffered(1))(*args)
    except Exception:
        out = build(None)(*args)

    # concat of per-glimpse [B, C, 1, 1] along dim 1, then torch.squeeze  ==  [B, G*C]
    # (note: for B == 1 torch.squeeze would also drop the batch dim; we keep [B, G*C]).
    return out.reshape(B, G * C)


def _reference(img_feature, qstatt_feature, wq, bq, wi, bi, w1, b1, w2, b2,
               *, mfb_out_dim, mfb_factor_num):
    """Pure-JAX mirror of the PyTorch forward (Dropout_M = identity at eval)."""
    B, C, S = img_feature.shape
    O, K = mfb_out_dim, mfb_factor_num
    G = w2.shape[0]
    q = qstatt_feature.reshape(B, -1)
    q_proj = q @ wq.T + bq                                                    # [B, J]
    i_conv = jnp.einsum('jc,bcs->bjs', wi, img_feature) + bi[None, :, None]   # [B, J, S]
    iq = q_proj[:, :, None] * i_conv
    z = jnp.transpose(iq, (0, 2, 1)).reshape(B, S, O, K).sum(axis=3)          # [B, S, O]
    z = jnp.transpose(z, (0, 2, 1))                                           # [B, O, S]
    y = jnp.sqrt(jnp.maximum(z, 0.0)) - jnp.sqrt(jnp.maximum(-z, 0.0))
    yf = y.reshape(B, -1)
    yf = yf / jnp.maximum(jnp.sqrt(jnp.sum(yf * yf, axis=1, keepdims=True)), 1e-12)
    y = yf.reshape(B, O, S)
    h = jnp.maximum(jnp.einsum('co,bos->bcs', w1, y) + b1[None, :, None], 0.0)
    a = jnp.einsum('gc,bcs->bgs', w2, h) + b2[None, :, None]
    p = jax.nn.softmax(a.reshape(B * G, S), axis=-1).reshape(B, G, S)
    out = jnp.einsum('bgs,bcs->bgc', p, img_feature)
    return out.reshape(B, G * C)


if __name__ == "__main__":
    # Small config consistent with the module:
    #   IMAGE_CHANNEL=32, IMG_FEAT_SIZE=16, MFB_OUT_DIM=16, MFB_FACTOR_NUM=4,
    #   NUM_IMG_GLIMPSE=2, BERT_UNIT_NUM=32, NUM_QUESTION_GLIMPSE=2
    B, C, S = 2, 32, 16
    O, K, G = 16, 4, 2
    BERT_UNIT_NUM, NUM_QUESTION_GLIMPSE = 32, 2
    Dq = BERT_UNIT_NUM * NUM_QUESTION_GLIMPSE
    J = O * K

    key = jax.random.PRNGKey(0)
    ks = jax.random.split(key, 10)
    img_feature = jax.random.normal(ks[0], (B, C, S), dtype=jnp.float32)
    qstatt_feature = jax.random.normal(ks[1], (B, Dq, 1, 1), dtype=jnp.float32)
    wq = jax.random.normal(ks[2], (J, Dq), dtype=jnp.float32) * 0.1   # Linear1_q_proj.weight
    bq = jax.random.normal(ks[3], (J,), dtype=jnp.float32) * 0.1
    wi = jax.random.normal(ks[4], (J, C), dtype=jnp.float32) * 0.1    # Conv_i_proj.weight[..., 0, 0]
    bi = jax.random.normal(ks[5], (J,), dtype=jnp.float32) * 0.1
    w1 = jax.random.normal(ks[6], (C, O), dtype=jnp.float32) * 0.1    # Conv1_Iatt.weight[..., 0, 0]
    b1 = jax.random.normal(ks[7], (C,), dtype=jnp.float32) * 0.1
    w2 = jax.random.normal(ks[8], (G, C), dtype=jnp.float32) * 0.1    # Conv2_Iatt.weight[..., 0, 0]
    b2 = jax.random.normal(ks[9], (G,), dtype=jnp.float32) * 0.1

    ref = _reference(img_feature, qstatt_feature, wq, bq, wi, bi, w1, b1, w2, b2,
                     mfb_out_dim=O, mfb_factor_num=K)

    # f32 path: exact-parity check.
    out = jax.block_until_ready(image_feature_extraction_att(
        img_feature, qstatt_feature, wq, bq, wi, bi, w1, b1, w2, b2,
        mfb_out_dim=O, mfb_factor_num=K))
    assert out.shape == (B, G * C), out.shape
    assert jnp.allclose(out, ref, atol=1e-3, rtol=1e-3), "f32 kernel mismatch vs reference"

    # bf16 MXU path (recommended default on v6e/v7x): exercise it and sanity-check loosely,
    # since bf16 operands intentionally perturb the numerics.
    out_bf16 = jax.block_until_ready(image_feature_extraction_att(
        img_feature, qstatt_feature, wq, bq, wi, bi, w1, b1, w2, b2,
        mfb_out_dim=O, mfb_factor_num=K, matmul_dtype=jnp.bfloat16))
    assert out_bf16.shape == (B, G * C), out_bf16.shape
    assert bool(jnp.all(jnp.isfinite(out_bf16)))
    assert jnp.allclose(out_bf16, ref, atol=1e-1, rtol=1e-1), "bf16 kernel diverged from reference"

    print("KERNEL_OK")
</pallas_src>

<mosaic_0001>
module attributes {stable_mosaic.version = 11 : i64} {
  func.func @_iatt_kernel(%arg0: i32, %arg1: memref<2x16x32xf32, #tpu.memory_space<vmem>>, %arg2: memref<2x1x64xf32, #tpu.memory_space<vmem>>, %arg3: memref<64x64xf32, #tpu.memory_space<vmem>>, %arg4: memref<32x64xf32, #tpu.memory_space<vmem>>, %arg5: memref<16x32xf32, #tpu.memory_space<vmem>>, %arg6: memref<32x2xf32, #tpu.memory_space<vmem>>, %arg7: memref<4x64xf32, #tpu.memory_space<vmem>>, %arg8: memref<2x2x32xf32, #tpu.memory_space<vmem>>) attributes {dimension_semantics = [#tpu.dimension_semantics<parallel>], iteration_bounds = array<i64: 1>, scalar_prefetch = 0 : i64, scratch_operands = 0 : i64, tpu.core_type = #tpu.core_type<tc>, window_params = [{transform_indices = @transform_0, window_bounds = array<i64: 2, 16, 32>}, {transform_indices = @transform_1, window_bounds = array<i64: 2, 1, 64>}, {pipeline_mode = #tpu.pipeline_mode<synchronous>, transform_indices = @transform_2, window_bounds = array<i64: 64, 64>}, {pipeline_mode = #tpu.pipeline_mode<synchronous>, transform_indices = @transform_3, window_bounds = array<i64: 32, 64>}, {pipeline_mode = #tpu.pipeline_mode<synchronous>, transform_indices = @transform_4, window_bounds = array<i64: 16, 32>}, {pipeline_mode = #tpu.pipeline_mode<synchronous>, transform_indices = @transform_5, window_bounds = array<i64: 32, 2>}, {pipeline_mode = #tpu.pipeline_mode<synchronous>, transform_indices = @transform_6, window_bounds = array<i64: 4, 64>}, {transform_indices = @transform_7, window_bounds = array<i64: 2, 2, 32>}]} {
    %c0 = arith.constant 0 : index
    %c0_0 = arith.constant 0 : index
    %c0_1 = arith.constant 0 : index
    %0 = vector.load %arg1[%c0, %c0_0, %c0_1] : memref<2x16x32xf32, #tpu.memory_space<vmem>>, vector<2x16x32xf32>
    %1 = vector.shape_cast %0 : vector<2x16x32xf32> to vector<32x32xf32>
    %c0_2 = arith.constant 0 : index
    %c0_3 = arith.constant 0 : index
    %2 = vector.load %arg7[%c0_2, %c0_3] : memref<4x64xf32, #tpu.memory_space<vmem>>, vector<1x64xf32>
    %c1 = arith.constant 1 : index
    %c0_4 = arith.constant 0 : index
    %3 = vector.load %arg7[%c1, %c0_4] : memref<4x64xf32, #tpu.memory_space<vmem>>, vector<1x64xf32>
    %c2 = arith.constant 2 : index
    %c0_5 = arith.constant 0 : index
    %4 = vector.load %arg7[%c2, %c0_5] : memref<4x64xf32, #tpu.memory_space<vmem>>, vector<1x32xf32>
    %c3 = arith.constant 3 : index
    %c0_6 = arith.constant 0 : index
    %5 = vector.load %arg7[%c3, %c0_6] : memref<4x64xf32, #tpu.memory_space<vmem>>, vector<1x2xf32>
    %c0_7 = arith.constant 0 : index
    %c0_8 = arith.constant 0 : index
    %c0_9 = arith.constant 0 : index
    %6 = vector.load %arg2[%c0_7, %c0_8, %c0_9] : memref<2x1x64xf32, #tpu.memory_space<vmem>>, vector<2x1x64xf32>
    %7 = vector.shape_cast %6 : vector<2x1x64xf32> to vector<2x64xf32>
    %c0_10 = arith.constant 0 : index
    %c0_11 = arith.constant 0 : index
    %8 = vector.load %arg3[%c0_10, %c0_11] : memref<64x64xf32, #tpu.memory_space<vmem>>, vector<64x64xf32>
    %cst = arith.constant dense<0.000000e+00> : vector<2x64xf32>
    %9 = tpu.matmul %7, %8, %cst {dimension_numbers = #tpu.dot_dimension_numbers<[1], [0], [0], [1], [0, 0, 1, 1], [], []>} : vector<2x64xf32>, vector<64x64xf32>, vector<2x64xf32> -> vector<2x64xf32>
    %10 = vector.broadcast %2 : vector<1x64xf32> to vector<2x64xf32>
    %11 = arith.addf %9, %10 : vector<2x64xf32>
    %c0_12 = arith.constant 0 : index
    %c0_13 = arith.constant 0 : index
    %12 = vector.load %arg4[%c0_12, %c0_13] : memref<32x64xf32, #tpu.memory_space<vmem>>, vector<32x64xf32>
    %cst_14 = arith.constant dense<0.000000e+00> : vector<32x64xf32>
    %13 = tpu.matmul %1, %12, %cst_14 {dimension_numbers = #tpu.dot_dimension_numbers<[1], [0], [0], [1], [0, 0, 1, 1], [], []>} : vector<32x32xf32>, vector<32x64xf32>, vector<32x64xf32> -> vector<32x64xf32>
    %14 = vector.broadcast %3 : vector<1x64xf32> to vector<32x64xf32>
    %15 = arith.addf %13, %14 : vector<32x64xf32>
    %16 = vector.shape_cast %15 : vector<32x64xf32> to vector<2x16x64xf32>
    %17 = vector.extract_strided_slice %16 {offsets = [0, 0, 0], sizes = [2, 16, 16], strides = [1, 1, 1]} : vector<2x16x64xf32> to vector<2x16x16xf32>
    %18 = vector.extract_strided_slice %11 {offsets = [0, 0], sizes = [2, 16], strides = [1, 1]} : vector<2x64xf32> to vector<2x16xf32>
    %19 = vector.shape_cast %18 : vector<2x16xf32> to vector<2x1x16xf32>
    %20 = vector.broadcast %19 : vector<2x1x16xf32> to vector<2x16x16xf32>
    %21 = arith.mulf %17, %20 : vector<2x16x16xf32>
    %22 = vector.extract_strided_slice %16 {offsets = [0, 0, 16], sizes = [2, 16, 16], strides = [1, 1, 1]} : vector<2x16x64xf32> to vector<2x16x16xf32>
    %23 = vector.extract_strided_slice %11 {offsets = [0, 16], sizes = [2, 16], strides = [1, 1]} : vector<2x64xf32> to vector<2x16xf32>
    %24 = vector.shape_cast %23 : vector<2x16xf32> to vector<2x1x16xf32>
    %25 = vector.broadcast %24 : vector<2x1x16xf32> to vector<2x16x16xf32>
    %26 = arith.mulf %22, %25 : vector<2x16x16xf32>
    %27 = arith.addf %21, %26 : vector<2x16x16xf32>
    %28 = vector.extract_strided_slice %16 {offsets = [0, 0, 32], sizes = [2, 16, 16], strides = [1, 1, 1]} : vector<2x16x64xf32> to vector<2x16x16xf32>
    %29 = vector.extract_strided_slice %11 {offsets = [0, 32], sizes = [2, 16], strides = [1, 1]} : vector<2x64xf32> to vector<2x16xf32>
    %30 = vector.shape_cast %29 : vector<2x16xf32> to vector<2x1x16xf32>
    %31 = vector.broadcast %30 : vector<2x1x16xf32> to vector<2x16x16xf32>
    %32 = arith.mulf %28, %31 : vector<2x16x16xf32>
    %33 = arith.addf %27, %32 : vector<2x16x16xf32>
    %34 = vector.extract_strided_slice %16 {offsets = [0, 0, 48], sizes = [2, 16, 16], strides = [1, 1, 1]} : vector<2x16x64xf32> to vector<2x16x16xf32>
    %35 = vector.extract_strided_slice %11 {offsets = [0, 48], sizes = [2, 16], strides = [1, 1]} : vector<2x64xf32> to vector<2x16xf32>
    %36 = vector.shape_cast %35 : vector<2x16xf32> to vector<2x1x16xf32>
    %37 = vector.broadcast %36 : vector<2x1x16xf32> to vector<2x16x16xf32>
    %38 = arith.mulf %34, %37 : vector<2x16x16xf32>
    %39 = arith.addf %33, %38 : vector<2x16x16xf32>
    %cst_15 = arith.constant 0.000000e+00 : f32
    %40 = vector.broadcast %cst_15 : f32 to vector<2x16x16xf32>
    %41 = arith.maximumf %39, %40 : vector<2x16x16xf32>
    %42 = math.sqrt %41 : vector<2x16x16xf32>
    %cst_16 = arith.constant 0.000000e+00 : f32
    %43 = vector.broadcast %cst_16 : f32 to vector<2x16x16xf32>
    %44 = arith.subf %43, %39 : vector<2x16x16xf32>
    %cst_17 = arith.constant 0.000000e+00 : f32
    %45 = vector.broadcast %cst_17 : f32 to vector<2x16x16xf32>
    %46 = arith.maximumf %44, %45 : vector<2x16x16xf32>
    %47 = math.sqrt %46 : vector<2x16x16xf32>
    %48 = arith.subf %42, %47 : vector<2x16x16xf32>
    %49 = arith.mulf %48, %48 : vector<2x16x16xf32>
    %cst_18 = arith.constant dense<0.000000e+00> : vector<2x16xf32>
    %50 = vector.multi_reduction <add>, %49, %cst_18 [2] : vector<2x16x16xf32> to vector<2x16xf32>
    %51 = vector.shape_cast %50 : vector<2x16xf32> to vector<2x16x1xf32>
    %cst_19 = arith.constant dense<0.000000e+00> : vector<2x1xf32>
    %52 = vector.multi_reduction <add>, %51, %cst_19 [1] : vector<2x16x1xf32> to vector<2x1xf32>
    %53 = vector.shape_cast %52 : vector<2x1xf32> to vector<2x1x1xf32>
    %cst_20 = arith.constant 1.000000e-24 : f32
    %54 = vector.broadcast %cst_20 : f32 to vector<2x1x1xf32>
    %55 = arith.maximumf %53, %54 : vector<2x1x1xf32>
    %56 = math.rsqrt %55 : vector<2x1x1xf32>
    %57 = vector.broadcast %56 : vector<2x1x1xf32> to vector<2x16x16xf32>
    %58 = arith.mulf %48, %57 : vector<2x16x16xf32>
    %59 = vector.shape_cast %58 : vector<2x16x16xf32> to vector<32x16xf32>
    %c0_21 = arith.constant 0 : index
    %c0_22 = arith.constant 0 : index
    %60 = vector.load %arg5[%c0_21, %c0_22] : memref<16x32xf32, #tpu.memory_space<vmem>>, vector<16x32xf32>
    %cst_23 = arith.constant dense<0.000000e+00> : vector<32x32xf32>
    %61 = tpu.matmul %59, %60, %cst_23 {dimension_numbers = #tpu.dot_dimension_numbers<[1], [0], [0], [1], [0, 0, 1, 1], [], []>} : vector<32x16xf32>, vector<16x32xf32>, vector<32x32xf32> -> vector<32x32xf32>
    %62 = vector.broadcast %4 : vector<1x32xf32> to vector<32x32xf32>
    %63 = arith.addf %61, %62 : vector<32x32xf32>
    %cst_24 = arith.constant 0.000000e+00 : f32
    %64 = vector.broadcast %cst_24 : f32 to vector<32x32xf32>
    %65 = arith.maximumf %63, %64 : vector<32x32xf32>
    %c0_25 = arith.constant 0 : index
    %c0_26 = arith.constant 0 : index
    %66 = vector.load %arg6[%c0_25, %c0_26] : memref<32x2xf32, #tpu.memory_space<vmem>>, vector<32x2xf32>
    %cst_27 = arith.constant dense<0.000000e+00> : vector<32x2xf32>
    %67 = tpu.matmul %65, %66, %cst_27 {dimension_numbers = #tpu.dot_dimension_numbers<[1], [0], [0], [1], [0, 0, 1, 1], [], []>} : vector<32x32xf32>, vector<32x2xf32>, vector<32x2xf32> -> vector<32x2xf32>
    %68 = vector.broadcast %5 : vector<1x2xf32> to vector<32x2xf32>
    %69 = arith.addf %67, %68 : vector<32x2xf32>
    %70 = vector.shape_cast %69 : vector<32x2xf32> to vector<2x16x2xf32>
    %71 = tpu.transpose %70, [0, 2, 1] : vector<2x16x2xf32> -> vector<2x2x16xf32>
    %cst_28 = arith.constant dense<0xFF800000> : vector<2x2xf32>
    %72 = vector.multi_reduction <maximumf>, %71, %cst_28 [2] : vector<2x2x16xf32> to vector<2x2xf32>
    %73 = vector.shape_cast %72 : vector<2x2xf32> to vector<2x2x1xf32>
    %74 = vector.broadcast %73 : vector<2x2x1xf32> to vector<2x2x16xf32>
    %75 = arith.subf %71, %74 : vector<2x2x16xf32>
    %76 = math.exp %75 : vector<2x2x16xf32>
    %cst_29 = arith.constant dense<0.000000e+00> : vector<2x2xf32>
    %77 = vector.multi_reduction <add>, %76, %cst_29 [2] : vector<2x2x16xf32> to vector<2x2xf32>
    %78 = vector.shape_cast %77 : vector<2x2xf32> to vector<2x2x1xf32>
    %79 = vector.broadcast %78 : vector<2x2x1xf32> to vector<2x2x16xf32>
    %80 = arith.divf %76, %79 : vector<2x2x16xf32>
    "tpu.trace_start"() <{level = 10 : i32, message = "bgs,bsc->bgc"}> : () -> ()
    %cst_30 = arith.constant dense<0.000000e+00> : vector<2x2x32xf32>
    %81 = tpu.matmul %80, %0, %cst_30 {dimension_numbers = #tpu.dot_dimension_numbers<[2], [1], [1], [2], [0, 0, 0, 1, 1, 2], [0], [0]>} : vector<2x2x16xf32>, vector<2x16x32xf32>, vector<2x2x32xf32> -> vector<2x2x32xf32>
    "tpu.trace_stop"() : () -> ()
    %c0_31 = arith.constant 0 : index
    %c0_32 = arith.constant 0 : index
    %c0_33 = arith.constant 0 : index
    %82 = vector.load %arg8[%c0_31, %c0_32, %c0_33] : memref<2x2x32xf32, #tpu.memory_space<vmem>>, vector<2x2x32xf32>
    tpu.vector_store %arg8[%c0_31, %c0_32, %c0_33], %81 {strides = array<i32>} : memref<2x2x32xf32, #tpu.memory_space<vmem>>, vector<2x2x32xf32>,
    return
  }
  func.func @transform_0(%arg0: i32) -> (i32, i32, i32) {
    %c0_i32 = arith.constant 0 : i32
    %c0_i32_0 = arith.constant 0 : i32
    %c0_i32_1 = arith.constant 0 : i32
    return %arg0, %c0_i32, %c0_i32_0 : i32, i32, i32
  }
  func.func @transform_1(%arg0: i32) -> (i32, i32, i32) {
    %c0_i32 = arith.constant 0 : i32
    %c0_i32_0 = arith.constant 0 : i32
    %c0_i32_1 = arith.constant 0 : i32
    return %arg0, %c0_i32, %c0_i32_0 : i32, i32, i32
  }
  func.func @transform_2(%arg0: i32) -> (i32, i32) {
    %c0_i32 = arith.constant 0 : i32
    %c0_i32_0 = arith.constant 0 : i32
    %c0_i32_1 = arith.constant 0 : i32
    return %c0_i32, %c0_i32_0 : i32, i32
  }
  func.func @transform_3(%arg0: i32) -> (i32, i32) {
    %c0_i32 = arith.constant 0 : i32
    %c0_i32_0 = arith.constant 0 : i32
    %c0_i32_1 = arith.constant 0 : i32
    return %c0_i32, %c0_i32_0 : i32, i32
  }
  func.func @transform_4(%arg0: i32) -> (i32, i32) {
    %c0_i32 = arith.constant 0 : i32
    %c0_i32_0 = arith.constant 0 : i32
    %c0_i32_1 = arith.constant 0 : i32
    return %c0_i32, %c0_i32_0 : i32, i32
  }
  func.func @transform_5(%arg0: i32) -> (i32, i32) {
    %c0_i32 = arith.constant 0 : i32
    %c0_i32_0 = arith.constant 0 : i32
    %c0_i32_1 = arith.constant 0 : i32
    return %c0_i32, %c0_i32_0 : i32, i32
  }
  func.func @transform_6(%arg0: i32) -> (i32, i32) {
    %c0_i32 = arith.constant 0 : i32
    %c0_i32_0 = arith.constant 0 : i32
    %c0_i32_1 = arith.constant 0 : i32
    return %c0_i32, %c0_i32_0 : i32, i32
  }
  func.func @transform_7(%arg0: i32) -> (i32, i32, i32) {
    %c0_i32 = arith.constant 0 : i32
    %c0_i32_0 = arith.constant 0 : i32
    %c0_i32_1 = arith.constant 0 : i32
    return %arg0, %c0_i32, %c0_i32_0 : i32, i32, i32
  }
}

module attributes {stable_mosaic.version = 11 : i64} {
  func.func @_iatt_kernel(%arg0: i32, %arg1: memref<2x16x32xf32, #tpu.memory_space<vmem>>, %arg2: memref<2x1x64xf32, #tpu.memory_space<vmem>>, %arg3: memref<64x64xf32, #tpu.memory_space<vmem>>, %arg4: memref<32x64xf32, #tpu.memory_space<vmem>>, %arg5: memref<16x32xf32, #tpu.memory_space<vmem>>, %arg6: memref<32x2xf32, #tpu.memory_space<vmem>>, %arg7: memref<4x64xf32, #tpu.memory_space<vmem>>, %arg8: memref<2x2x32xf32, #tpu.memory_space<vmem>>) attributes {dimension_semantics = [#tpu.dimension_semantics<parallel>], iteration_bounds = array<i64: 1>, scalar_prefetch = 0 : i64, scratch_operands = 0 : i64, tpu.core_type = #tpu.core_type<tc>, window_params = [{transform_indices = @transform_0, window_bounds = array<i64: 2, 16, 32>}, {transform_indices = @transform_1, window_bounds = array<i64: 2, 1, 64>}, {pipeline_mode = #tpu.pipeline_mode<synchronous>, transform_indices = @transform_2, window_bounds = array<i64: 64, 64>}, {pipeline_mode = #tpu.pipeline_mode<synchronous>, transform_indices = @transform_3, window_bounds = array<i64: 32, 64>}, {pipeline_mode = #tpu.pipeline_mode<synchronous>, transform_indices = @transform_4, window_bounds = array<i64: 16, 32>}, {pipeline_mode = #tpu.pipeline_mode<synchronous>, transform_indices = @transform_5, window_bounds = array<i64: 32, 2>}, {pipeline_mode = #tpu.pipeline_mode<synchronous>, transform_indices = @transform_6, window_bounds = array<i64: 4, 64>}, {transform_indices = @transform_7, window_bounds = array<i64: 2, 2, 32>}]} {
    %c0 = arith.constant 0 : index
    %c0_0 = arith.constant 0 : index
    %c0_1 = arith.constant 0 : index
    %0 = vector.load %arg1[%c0, %c0_0, %c0_1] : memref<2x16x32xf32, #tpu.memory_space<vmem>>, vector<2x16x32xf32>
    %1 = vector.shape_cast %0 : vector<2x16x32xf32> to vector<32x32xf32>
    %c0_2 = arith.constant 0 : index
    %c0_3 = arith.constant 0 : index
    %2 = vector.load %arg7[%c0_2, %c0_3] : memref<4x64xf32, #tpu.memory_space<vmem>>, vector<1x64xf32>
    %c1 = arith.constant 1 : index
    %c0_4 = arith.constant 0 : index
    %3 = vector.load %arg7[%c1, %c0_4] : memref<4x64xf32, #tpu.memory_space<vmem>>, vector<1x64xf32>
    %c2 = arith.constant 2 : index
    %c0_5 = arith.constant 0 : index
    %4 = vector.load %arg7[%c2, %c0_5] : memref<4x64xf32, #tpu.memory_space<vmem>>, vector<1x32xf32>
    %c3 = arith.constant 3 : index
    %c0_6 = arith.constant 0 : index
    %5 = vector.load %arg7[%c3, %c0_6] : memref<4x64xf32, #tpu.memory_space<vmem>>, vector<1x2xf32>
    %c0_7 = arith.constant 0 : index
    %c0_8 = arith.constant 0 : index
    %c0_9 = arith.constant 0 : index
    %6 = vector.load %arg2[%c0_7, %c0_8, %c0_9] : memref<2x1x64xf32, #tpu.memory_space<vmem>>, vector<2x1x64xf32>
    %7 = vector.shape_cast %6 : vector<2x1x64xf32> to vector<2x64xf32>
    %c0_10 = arith.constant 0 : index
    %c0_11 = arith.constant 0 : index
    %8 = vector.load %arg3[%c0_10, %c0_11] : memref<64x64xf32, #tpu.memory_space<vmem>>, vector<64x64xf32>
    %cst = arith.constant dense<0.000000e+00> : vector<2x64xf32>
    %9 = tpu.matmul %7, %8, %cst {dimension_numbers = #tpu.dot_dimension_numbers<[1], [0], [0], [1], [0, 0, 1, 1], [], []>} : vector<2x64xf32>, vector<64x64xf32>, vector<2x64xf32> -> vector<2x64xf32>
    %10 = vector.broadcast %2 : vector<1x64xf32> to vector<2x64xf32>
    %11 = arith.addf %9, %10 : vector<2x64xf32>
    %c0_12 = arith.constant 0 : index
    %c0_13 = arith.constant 0 : index
    %12 = vector.load %arg4[%c0_12, %c0_13] : memref<32x64xf32, #tpu.memory_space<vmem>>, vector<32x64xf32>
    %cst_14 = arith.constant dense<0.000000e+00> : vector<32x64xf32>
    %13 = tpu.matmul %1, %12, %cst_14 {dimension_numbers = #tpu.dot_dimension_numbers<[1], [0], [0], [1], [0, 0, 1, 1], [], []>} : vector<32x32xf32>, vector<32x64xf32>, vector<32x64xf32> -> vector<32x64xf32>
    %14 = vector.broadcast %3 : vector<1x64xf32> to vector<32x64xf32>
    %15 = arith.addf %13, %14 : vector<32x64xf32>
    %16 = vector.shape_cast %15 : vector<32x64xf32> to vector<2x16x64xf32>
    %17 = vector.extract_strided_slice %16 {offsets = [0, 0, 0], sizes = [2, 16, 16], strides = [1, 1, 1]} : vector<2x16x64xf32> to vector<2x16x16xf32>
    %18 = vector.extract_strided_slice %11 {offsets = [0, 0], sizes = [2, 16], strides = [1, 1]} : vector<2x64xf32> to vector<2x16xf32>
    %19 = vector.shape_cast %18 : vector<2x16xf32> to vector<2x1x16xf32>
    %20 = vector.broadcast %19 : vector<2x1x16xf32> to vector<2x16x16xf32>
    %21 = arith.mulf %17, %20 : vector<2x16x16xf32>
    %22 = vector.extract_strided_slice %16 {offsets = [0, 0, 16], sizes = [2, 16, 16], strides = [1, 1, 1]} : vector<2x16x64xf32> to vector<2x16x16xf32>
    %23 = vector.extract_strided_slice %11 {offsets = [0, 16], sizes = [2, 16], strides = [1, 1]} : vector<2x64xf32> to vector<2x16xf32>
    %24 = vector.shape_cast %23 : vector<2x16xf32> to vector<2x1x16xf32>
    %25 = vector.broadcast %24 : vector<2x1x16xf32> to vector<2x16x16xf32>
    %26 = arith.mulf %22, %25 : vector<2x16x16xf32>
    %27 = arith.addf %21, %26 : vector<2x16x16xf32>
    %28 = vector.extract_strided_slice %16 {offsets = [0, 0, 32], sizes = [2, 16, 16], strides = [1, 1, 1]} : vector<2x16x64xf32> to vector<2x16x16xf32>
    %29 = vector.extract_strided_slice %11 {offsets = [0, 32], sizes = [2, 16], strides = [1, 1]} : vector<2x64xf32> to vector<2x16xf32>
    %30 = vector.shape_cast %29 : vector<2x16xf32> to vector<2x1x16xf32>
    %31 = vector.broadcast %30 : vector<2x1x16xf32> to vector<2x16x16xf32>
    %32 = arith.mulf %28, %31 : vector<2x16x16xf32>
    %33 = arith.addf %27, %32 : vector<2x16x16xf32>
    %34 = vector.extract_strided_slice %16 {offsets = [0, 0, 48], sizes = [2, 16, 16], strides = [1, 1, 1]} : vector<2x16x64xf32> to vector<2x16x16xf32>
    %35 = vector.extract_strided_slice %11 {offsets = [0, 48], sizes = [2, 16], strides = [1, 1]} : vector<2x64xf32> to vector<2x16xf32>
    %36 = vector.shape_cast %35 : vector<2x16xf32> to vector<2x1x16xf32>
    %37 = vector.broadcast %36 : vector<2x1x16xf32> to vector<2x16x16xf32>
    %38 = arith.mulf %34, %37 : vector<2x16x16xf32>
    %39 = arith.addf %33, %38 : vector<2x16x16xf32>
    %cst_15 = arith.constant 0.000000e+00 : f32
    %40 = vector.broadcast %cst_15 : f32 to vector<2x16x16xf32>
    %41 = arith.maximumf %39, %40 : vector<2x16x16xf32>
    %42 = math.sqrt %41 : vector<2x16x16xf32>
    %cst_16 = arith.constant 0.000000e+00 : f32
    %43 = vector.broadcast %cst_16 : f32 to vector<2x16x16xf32>
    %44 = arith.subf %43, %39 : vector<2x16x16xf32>
    %cst_17 = arith.constant 0.000000e+00 : f32
    %45 = vector.broadcast %cst_17 : f32 to vector<2x16x16xf32>
    %46 = arith.maximumf %44, %45 : vector<2x16x16xf32>
    %47 = math.sqrt %46 : vector<2x16x16xf32>
    %48 = arith.subf %42, %47 : vector<2x16x16xf32>
    %49 = arith.mulf %48, %48 : vector<2x16x16xf32>
    %cst_18 = arith.constant dense<0.000000e+00> : vector<2x16xf32>
    %50 = vector.multi_reduction <add>, %49, %cst_18 [2] : vector<2x16x16xf32> to vector<2x16xf32>
    %51 = vector.shape_cast %50 : vector<2x16xf32> to vector<2x16x1xf32>
    %cst_19 = arith.constant dense<0.000000e+00> : vector<2x1xf32>
    %52 = vector.multi_reduction <add>, %51, %cst_19 [1] : vector<2x16x1xf32> to vector<2x1xf32>
    %53 = vector.shape_cast %52 : vector<2x1xf32> to vector<2x1x1xf32>
    %cst_20 = arith.constant 1.000000e-24 : f32
    %54 = vector.broadcast %cst_20 : f32 to vector<2x1x1xf32>
    %55 = arith.maximumf %53, %54 : vector<2x1x1xf32>
    %56 = math.rsqrt %55 : vector<2x1x1xf32>
    %57 = vector.broadcast %56 : vector<2x1x1xf32> to vector<2x16x16xf32>
    %58 = arith.mulf %48, %57 : vector<2x16x16xf32>
    %59 = vector.shape_cast %58 : vector<2x16x16xf32> to vector<32x16xf32>
    %c0_21 = arith.constant 0 : index
    %c0_22 = arith.constant 0 : index
    %60 = vector.load %arg5[%c0_21, %c0_22] : memref<16x32xf32, #tpu.memory_space<vmem>>, vector<16x32xf32>
    %cst_23 = arith.constant dense<0.000000e+00> : vector<32x32xf32>
    %61 = tpu.matmul %59, %60, %cst_23 {dimension_numbers = #tpu.dot_dimension_numbers<[1], [0], [0], [1], [0, 0, 1, 1], [], []>} : vector<32x16xf32>, vector<16x32xf32>, vector<32x32xf32> -> vector<32x32xf32>
    %62 = vector.broadcast %4 : vector<1x32xf32> to vector<32x32xf32>
    %63 = arith.addf %61, %62 : vector<32x32xf32>
    %cst_24 = arith.constant 0.000000e+00 : f32
    %64 = vector.broadcast %cst_24 : f32 to vector<32x32xf32>
    %65 = arith.maximumf %63, %64 : vector<32x32xf32>
    %c0_25 = arith.constant 0 : index
    %c0_26 = arith.constant 0 : index
    %66 = vector.load %arg6[%c0_25, %c0_26] : memref<32x2xf32, #tpu.memory_space<vmem>>, vector<32x2xf32>
    %cst_27 = arith.constant dense<0.000000e+00> : vector<32x2xf32>
    %67 = tpu.matmul %65, %66, %cst_27 {dimension_numbers = #tpu.dot_dimension_numbers<[1], [0], [0], [1], [0, 0, 1, 1], [], []>} : vector<32x32xf32>, vector<32x2xf32>, vector<32x2xf32> -> vector<32x2xf32>
    %68 = vector.broadcast %5 : vector<1x2xf32> to vector<32x2xf32>
    %69 = arith.addf %67, %68 : vector<32x2xf32>
    %70 = vector.shape_cast %69 : vector<32x2xf32> to vector<2x16x2xf32>
    %71 = tpu.transpose %70, [0, 2, 1] : vector<2x16x2xf32> -> vector<2x2x16xf32>
    %cst_28 = arith.constant dense<0xFF800000> : vector<2x2xf32>
    %72 = vector.multi_reduction <maximumf>, %71, %cst_28 [2] : vector<2x2x16xf32> to vector<2x2xf32>
    %73 = vector.shape_cast %72 : vector<2x2xf32> to vector<2x2x1xf32>
    %74 = vector.broadcast %73 : vector<2x2x1xf32> to vector<2x2x16xf32>
    %75 = arith.subf %71, %74 : vector<2x2x16xf32>
    %76 = math.exp %75 : vector<2x2x16xf32>
    %cst_29 = arith.constant dense<0.000000e+00> : vector<2x2xf32>
    %77 = vector.multi_reduction <add>, %76, %cst_29 [2] : vector<2x2x16xf32> to vector<2x2xf32>
    %78 = vector.shape_cast %77 : vector<2x2xf32> to vector<2x2x1xf32>
    %79 = vector.broadcast %78 : vector<2x2x1xf32> to vector<2x2x16xf32>
    %80 = arith.divf %76, %79 : vector<2x2x16xf32>
    "tpu.trace_start"() <{level = 10 : i32, message = "bgs,bsc->bgc"}> : () -> ()
    %cst_30 = arith.constant dense<0.000000e+00> : vector<2x2x32xf32>
    %81 = tpu.matmul %80, %0, %cst_30 {dimension_numbers = #tpu.dot_dimension_numbers<[2], [1], [1], [2], [0, 0, 0, 1, 1, 2], [0], [0]>} : vector<2x2x16xf32>, vector<2x16x32xf32>, vector<2x2x32xf32> -> vector<2x2x32xf32>
    "tpu.trace_stop"() : () -> ()
    %c0_31 = arith.constant 0 : index
    %c0_32 = arith.constant 0 : index
    %c0_33 = arith.constant 0 : index
    %82 = vector.load %arg8[%c0_31, %c0_32, %c0_33] : memref<2x2x32xf32, #tpu.memory_space<vmem>>, vector<2x2x32xf32>
    tpu.vector_store %arg8[%c0_31, %c0_32, %c0_33], %81 {strides = array<i32>} : memref<2x2x32xf32, #tpu.memory_space<vmem>>, vector<2x2x32xf32>,
    return
  }
  func.func @transform_0(%arg0: i32) -> (i32, i32, i32) {
    %c0_i32 = arith.constant 0 : i32
    %c0_i32_0 = arith.constant 0 : i32
    %c0_i32_1 = arith.constant 0 : i32
    return %arg0, %c0_i32, %c0_i32_0 : i32, i32, i32
  }
  func.func @transform_1(%arg0: i32) -> (i32, i32, i32) {
    %c0_i32 = arith.constant 0 : i32
    %c0_i32_0 = arith.constant 0 : i32
    %c0_i32_1 = arith.constant 0 : i32
    return %arg0, %c0_i32, %c0_i32_0 : i32, i32, i32
  }
  func.func @transform_2(%arg0: i32) -> (i32, i32) {
    %c0_i32 = arith.constant 0 : i32
    %c0_i32_0 = arith.constant 0 : i32
    %c0_i32_1 = arith.constant 0 : i32
    return %c0_i32, %c0_i32_0 : i32, i32
  }
  func.func @transform_3(%arg0: i32) -> (i32, i32) {
    %c0_i32 = arith.constant 0 : i32
    %c0_i32_0 = arith.constant 0 : i32
    %c0_i32_1 = arith.constant 0 : i32
    return %c0_i32, %c0_i32_0 : i32, i32
  }
  func.func @transform_4(%arg0: i32) -> (i32, i32) {
    %c0_i32 = arith.constant 0 : i32
    %c0_i32_0 = arith.constant 0 : i32
    %c0_i32_1 = arith.constant 0 : i32
    return %c0_i32, %c0_i32_0 : i32, i32
  }
  func.func @transform_5(%arg0: i32) -> (i32, i32) {
    %c0_i32 = arith.constant 0 : i32
    %c0_i32_0 = arith.constant 0 : i32
    %c0_i32_1 = arith.constant 0 : i32
    return %c0_i32, %c0_i32_0 : i32, i32
  }
  func.func @transform_6(%arg0: i32) -> (i32, i32) {
    %c0_i32 = arith.constant 0 : i32
    %c0_i32_0 = arith.constant 0 : i32
    %c0_i32_1 = arith.constant 0 : i32
    return %c0_i32, %c0_i32_0 : i32, i32
  }
  func.func @transform_7(%arg0: i32) -> (i32, i32, i32) {
    %c0_i32 = arith.constant 0 : i32
    %c0_i32_0 = arith.constant 0 : i32
    %c0_i32_1 = arith.constant 0 : i32
    return %arg0, %c0_i32, %c0_i32_0 : i32, i32, i32
  }
}

</mosaic_0001>

<llo_original>
// kernel: tpu_custom_call.1
$region0: #{tpu_custom_call.1}
  #allocation0 [shape = 'u32[]', space=smem, size = 0x4, offset = 0x4, fixed_abs, tag = 'smem constant byte address 0x4 - core index']
  #allocation1 [shape = 'u32[144,128]{1,0:T(1,128)}', space=vmem, size = 0x12000, scoped, tag = 'internal scratch']
  %s0 = inlined_call_operand.vmem [shape: f32[2,16,32], index: 0, kind: input, shape index: {}]
  %s1 = inlined_call_operand.hbm [shape: f32[2,1,64], index: 1, kind: input, shape index: {}]
  %s2 = inlined_call_operand.hbm [shape: f32[64,64], index: 2, kind: input, shape index: {}]
  %s3 = inlined_call_operand.hbm [shape: f32[32,64], index: 3, kind: input, shape index: {}]
  %s4 = inlined_call_operand.vmem [shape: f32[16,32], index: 4, kind: input, shape index: {}]
  %s5 = inlined_call_operand.vmem [shape: f32[32,2], index: 5, kind: input, shape index: {}]
  %s6 = inlined_call_operand.vmem [shape: f32[4,64], index: 6, kind: input, shape index: {}]
  %s7 = inlined_call_operand.hbm [shape: f32[2,2,32], index: 7, kind: output, shape index: {}]
  %s8 = sld [smem:[#allocation0]]
  $region50: #{tpu_custom_call.1} parent=0
    _
  %s10 = ssub.s32 1, %s8
  %s11 = scalar_select 0, %s10, %s8
  $region1: #{tpu_custom_call.1} parent=0
    #allocation2 [shape = 'u8[1024]{0}', space=vmem, size = 0x400, scoped, tag = 'input window, operand 1, single buffered']
    #allocation3 [shape = 's32[1]{0}', space=sflag, size = 0x4, scoped, tag = 'scoped memory for tpu_custom_call.1']
    #allocation4 [shape = 's32[1]{0}', space=sflag, size = 0x4, scoped, tag = 'scoped memory for tpu_custom_call.1']
    #allocation5 [shape = 'u8[32768]{0}', space=vmem, size = 0x8000, scoped, tag = 'input window, operand 2, single buffered']
    #allocation6 [shape = 's32[1]{0}', space=sflag, size = 0x4, scoped, tag = 'scoped memory for tpu_custom_call.1']
    #allocation7 [shape = 'u8[16384]{0}', space=vmem, size = 0x4000, scoped, tag = 'input window, operand 3, single buffered']
    #allocation8 [shape = 'u8[2048]{0}', space=vmem, size = 0x800, scoped, tag = 'output window, operand 0, single buffered']
    %12 = vsyncpa [#allocation3], 0
    %13 = vsyncpa [#allocation6], 0
    %14 = vsyncpa [#allocation4], 0
    // Predicated region
    $region2: #{tpu_custom_call.1} parent=1 // pred_check
      _
    $region3: #{tpu_custom_call.1} parent=1 // pred_check_branch
      %16 = sbr.rel (0) target = $region5
    $region4: #{tpu_custom_call.1} parent=1 // pred_region
      _
    $region5: #{tpu_custom_call.1} parent=1 // pred_fallthru
      _
    // Predicated region
    $region6: #{tpu_custom_call.1} parent=1 // pred_check
      _
    $region7: #{tpu_custom_call.1} parent=1 // pred_check_branch
      %18 = sbr.rel (0) target = $region9
    $region8: #{tpu_custom_call.1} parent=1 // pred_region
      %s20 = ssub.s32 32, 32
      %21 = vsyncadd [#allocation3], %s20
      %s22 = sshll.u32 [#allocation2], 4
      %s23 = int_to_ptr.vmem [resolvable:$true] %s22
      %28 = dma.hbm_to_vmem [thread:$0]  %s1, 32, %s23, [#allocation3], 16, 16, 1
    $region9: #{tpu_custom_call.1} parent=1 // pred_fallthru
      _
    // Predicated region
    $region10: #{tpu_custom_call.1} parent=1 // pred_check
      _
    $region11: #{tpu_custom_call.1} parent=1 // pred_check_branch
      %30 = sbr.rel (0) target = $region13
    $region12: #{tpu_custom_call.1} parent=1 // pred_region
      %s32 = ssub.s32 1024, 1024
      %33 = vsyncadd [#allocation6], %s32
      %s34 = sshll.u32 [#allocation5], 4
      %s35 = int_to_ptr.vmem [resolvable:$true] %s34
      %40 = dma.hbm_to_vmem [thread:$0]  %s2, 1024, %s35, [#allocation6], 128, 128, 8
    $region13: #{tpu_custom_call.1} parent=1 // pred_fallthru
      _
    // Predicated region
    $region14: #{tpu_custom_call.1} parent=1 // pred_check
      _
    $region15: #{tpu_custom_call.1} parent=1 // pred_check_branch
      %42 = sbr.rel (0) target = $region17
    $region16: #{tpu_custom_call.1} parent=1 // pred_region
      %s44 = ssub.s32 512, 512
      %45 = vsyncadd [#allocation6], %s44
      %s46 = sshll.u32 [#allocation7], 4
      %s47 = int_to_ptr.vmem [resolvable:$true] %s46
      %52 = dma.hbm_to_vmem [thread:$0]  %s3, 512, %s47, [#allocation6], 128, 128, 8
    $region17: #{tpu_custom_call.1} parent=1 // pred_fallthru
      _
    // Predicated region
    $region18: #{tpu_custom_call.1} parent=1 // pred_check
      _
    $region19: #{tpu_custom_call.1} parent=1 // pred_check_branch
      %54 = sbr.rel (0) target = $region21
    $region20: #{tpu_custom_call.1} parent=1 // pred_region
      _
    $region21: #{tpu_custom_call.1} parent=1 // pred_fallthru
      _
    // Predicated region
    $region22: #{tpu_custom_call.1} parent=1 // pred_check
      _
    $region23: #{tpu_custom_call.1} parent=1 // pred_check_branch
      %56 = sbr.rel (0) target = $region25
    $region24: #{tpu_custom_call.1} parent=1 // pred_region
      _
    $region25: #{tpu_custom_call.1} parent=1 // pred_fallthru
      _
    // Predicated region
    $region26: #{tpu_custom_call.1} parent=1 // pred_check
      _
    $region27: #{tpu_custom_call.1} parent=1 // pred_check_branch
      %58 = sbr.rel (0) target = $region29
    $region28: #{tpu_custom_call.1} parent=1 // pred_region
      _
    $region29: #{tpu_custom_call.1} parent=1 // pred_fallthru
      _
    // Predicated region
    $region30: #{tpu_custom_call.1} parent=1 // pred_check
      _
    $region31: #{tpu_custom_call.1} parent=1 // pred_check_branch
      %60 = sbr.rel (0) target = $region33
    $region32: #{tpu_custom_call.1} parent=1 // pred_region
      %61 = dma.done [#allocation3], 32
    $region33: #{tpu_custom_call.1} parent=1 // pred_fallthru
      _
    // Predicated region
    $region34: #{tpu_custom_call.1} parent=1 // pred_check
      _
    $region35: #{tpu_custom_call.1} parent=1 // pred_check_branch
      %63 = sbr.rel (0) target = $region37
    $region36: #{tpu_custom_call.1} parent=1 // pred_region
      %64 = dma.done [#allocation6], 1024
    $region37: #{tpu_custom_call.1} parent=1 // pred_fallthru
      _
    // Predicated region
    $region38: #{tpu_custom_call.1} parent=1 // pred_check
      _
    $region39: #{tpu_custom_call.1} parent=1 // pred_check_branch
      %66 = sbr.rel (0) target = $region41
    $region40: #{tpu_custom_call.1} parent=1 // pred_region
      %67 = dma.done [#allocation6], 512
    $region41: #{tpu_custom_call.1} parent=1 // pred_fallthru
      _
    %v68 = vld [vmem:[%s0] sm:$0xff]
    %v69 = vld [vmem:[%s0 + $0x8] sm:$0xff]
    %v70 = vld [vmem:[%s0 + $0x10] sm:$0xff]
    %v71 = vld [vmem:[%s0 + $0x18] sm:$0xff]
    %v72 = vld [vmem:[%s6] sm:$0x1]
    %v73 = vld [vmem:[%s6 + $0x1] sm:$0x1]
    %v74 = vld [vmem:[%s6 + $0x2] sm:$0x1]
    %v75 = vld [vmem:[%s6 + $0x3] sm:$0x1]
    %v76 = vld [vmem:[#allocation2] sm:$0x1]
    %v77 = vld [vmem:[#allocation2 + $0x1] sm:$0x1]
    %v78 = vld [vmem:[#allocation5] sm:$0xff]
    %v79 = vld [vmem:[#allocation5 + $0x8] sm:$0xff]
    %v80 = vld [vmem:[#allocation5 + $0x10] sm:$0xff]
    %v81 = vld [vmem:[#allocation5 + $0x18] sm:$0xff]
    %v82 = vld [vmem:[#allocation5 + $0x20] sm:$0xff]
    %v83 = vld [vmem:[#allocation5 + $0x28] sm:$0xff]
    %v84 = vld [vmem:[#allocation5 + $0x30] sm:$0xff]
    %v85 = vld [vmem:[#allocation5 + $0x38] sm:$0xff]
    %v86 = vlaneseq
    %v87 = vshrl.u32 %v86, 7
    %v88 = vsub.s32 0, %v87
    %v89 = vrot.slane %v72, %v88
    %v92 = vcombine.low %v76, %v77
    %v94 = vunpack.c.l.s4 1966171168
    %v95 = vunpack.c.0.s8 %v94
    %v96 = vlaneseq
    %v97 = vshrl.u32 %v96, 7
    %v98 = vsub.s32 %v95, %v97
    %v99 = vrot.slane %v92, %v98
    %v101 = vunpack.c.l.s4 1966171168
    %v102 = vunpack.c.0.s8 %v101
    %v103 = vlaneseq
    %v104 = vshrl.u32 %v103, 7
    %v105 = vsub.s32 %v102, %v104
    %v106 = vrot.slane %v99, %v105
    %vm107 = vcmask 523264
    %v108 = vsel %vm107, %v106, 0
    %110 = vmatprep.subr.mxu0 0.0
    %111 = vmatpush1.msra.mxu0 %v78
    %112 = vmatprep.subr.mxu0 0.0
    %113 = vmatpush1.msra.mxu0 %v79
    %114 = vmatprep.subr.mxu0 0.0
    %115 = vmatpush1.msra.mxu0 %v80
    %116 = vmatprep.subr.mxu0 0.0
    %117 = vmatpush1.msra.mxu0 %v81
    %118 = vmatprep.subr.mxu0 0.0
    %119 = vmatpush1.msra.mxu0 %v82
    %120 = vmatprep.subr.mxu0 0.0
    %121 = vmatpush1.msra.mxu0 %v83
    %122 = vmatprep.subr.mxu0 0.0
    %123 = vmatpush1.msra.mxu0 %v84
    %124 = vmatprep.subr.mxu0 0.0
    %125 = vmatpush1.msra.mxu0 %v85
    %126 = vmatprep.subr.mxu0 0.0
    %127 = vmatpush1.msra.mxu0 0.0
    %128 = vmatprep.subr.mxu0 0.0
    %129 = vmatpush1.msra.mxu0 0.0
    %130 = vmatprep.subr.mxu0 0.0
    %131 = vmatpush1.msra.mxu0 0.0
    %132 = vmatprep.subr.mxu0 0.0
    %133 = vmatpush1.msra.mxu0 0.0
    %134 = vmatprep.subr.mxu0 0.0
    %135 = vmatpush1.msra.mxu0 0.0
    %136 = vmatprep.subr.mxu0 0.0
    %137 = vmatpush1.msra.mxu0 0.0
    %138 = vmatprep.subr.mxu0 0.0
    %139 = vmatpush1.msra.mxu0 0.0
    %140 = vmatprep.subr.mxu0 0.0
    %141 = vmatpush1.msra.mxu0 0.0
    %142 = vmatprep.subr.mxu0 0.0
    %143 = vmatpush1.msra.mxu0 0.0
    %144 = vmatprep.subr.mxu0 0.0
    %145 = vmatpush1.msra.mxu0 0.0
    %146 = vmatprep.subr.mxu0 0.0
    %147 = vmatpush1.msra.mxu0 0.0
    %148 = vmatprep.subr.mxu0 0.0
    %149 = vmatpush1.msra.mxu0 0.0
    %150 = vmatprep.subr.mxu0 0.0
    %151 = vmatpush1.msra.mxu0 0.0
    %152 = vmatprep.subr.mxu0 0.0
    %153 = vmatpush1.msra.mxu0 0.0
    %154 = vmatprep.subr.mxu0 0.0
    %155 = vmatpush1.msra.mxu0 0.0
    %156 = vmatprep.subr.mxu0 0.0
    %157 = vmatpush1.msra.mxu0 0.0
    %158 = vmatprep.subr.mxu0 0.0
    %159 = vmatpush1.msra.mxu0 0.0
    %160 = vmatprep.subr.mxu0 0.0
    %161 = vmatpush1.msra.mxu0 0.0
    %162 = vmatprep.subr.mxu0 0.0
    %163 = vmatpush1.msra.mxu0 0.0
    %164 = vmatprep.subr.mxu0 0.0
    %165 = vmatpush1.msra.mxu0 0.0
    %166 = vmatprep.subr.mxu0 0.0
    %167 = vmatpush1.msra.mxu0 0.0
    %168 = vmatprep.subr.mxu0 0.0
    %169 = vmatpush1.msra.mxu0 0.0
    %170 = vmatprep.subr.mxu0 0.0
    %171 = vmatpush1.msra.mxu0 0.0
    %172 = vmatprep.subr.mxu0 0.0
    %173 = vmatpush1.msra.mxu0 0.0
    %174 = vmatprep.mubr.f32.mxu0 0.0
    %175 = vmatmul.mubr.f32.gmra.mrb[0].mxu0 %v108
    %v176 = vpop.f32.mrb[0].mxu0
    %v177 = vadd.f32 %v89, %v176
    %v178 = vpop.f32.mrb[0].mxu0
    %179 = vdwg.mxu0
    %v180 = vld [vmem:[#allocation7] sm:$0xff]
    %v181 = vld [vmem:[#allocation7 + $0x8] sm:$0xff]
    %v182 = vld [vmem:[#allocation7 + $0x10] sm:$0xff]
    %v183 = vld [vmem:[#allocation7 + $0x18] sm:$0xff]
    %v184 = vlaneseq
    %v185 = vshrl.u32 %v184, 7
    %v186 = vsub.s32 0, %v185
    %v187 = vrot.slane %v73, %v186
    %vm188 = vcmask 261120
    %v190 = vsel %vm188, %v68, 0
    %v193 = vsel %vm188, %v69, 0
    %v196 = vsel %vm188, %v70, 0
    %v199 = vsel %vm188, %v71, 0
    %201 = vmatprep.subr.mxu0 0.0
    %202 = vmatpush1.msra.mxu0 %v180
    %203 = vmatprep.subr.mxu0 0.0
    %204 = vmatpush1.msra.mxu0 %v181
    %205 = vmatprep.subr.mxu0 0.0
    %206 = vmatpush1.msra.mxu0 %v182
    %207 = vmatprep.subr.mxu0 0.0
    %208 = vmatpush1.msra.mxu0 %v183
    %209 = vmatprep.subr.mxu0 0.0
    %210 = vmatpush1.msra.mxu0 0.0
    %211 = vmatprep.subr.mxu0 0.0
    %212 = vmatpush1.msra.mxu0 0.0
    %213 = vmatprep.subr.mxu0 0.0
    %214 = vmatpush1.msra.mxu0 0.0
    %215 = vmatprep.subr.mxu0 0.0
    %216 = vmatpush1.msra.mxu0 0.0
    %217 = vmatprep.subr.mxu0 0.0
    %218 = vmatpush1.msra.mxu0 0.0
    %219 = vmatprep.subr.mxu0 0.0
    %220 = vmatpush1.msra.mxu0 0.0
    %221 = vmatprep.subr.mxu0 0.0
    %222 = vmatpush1.msra.mxu0 0.0
    %223 = vmatprep.subr.mxu0 0.0
    %224 = vmatpush1.msra.mxu0 0.0
    %225 = vmatprep.subr.mxu0 0.0
    %226 = vmatpush1.msra.mxu0 0.0
    %227 = vmatprep.subr.mxu0 0.0
    %228 = vmatpush1.msra.mxu0 0.0
    %229 = vmatprep.subr.mxu0 0.0
    %230 = vmatpush1.msra.mxu0 0.0
    %231 = vmatprep.subr.mxu0 0.0
    %232 = vmatpush1.msra.mxu0 0.0
    %233 = vmatprep.subr.mxu0 0.0
    %234 = vmatpush1.msra.mxu0 0.0
    %235 = vmatprep.subr.mxu0 0.0
    %236 = vmatpush1.msra.mxu0 0.0
    %237 = vmatprep.subr.mxu0 0.0
    %238 = vmatpush1.msra.mxu0 0.0
    %239 = vmatprep.subr.mxu0 0.0
    %240 = vmatpush1.msra.mxu0 0.0
    %241 = vmatprep.subr.mxu0 0.0
    %242 = vmatpush1.msra.mxu0 0.0
    %243 = vmatprep.subr.mxu0 0.0
    %244 = vmatpush1.msra.mxu0 0.0
    %245 = vmatprep.subr.mxu0 0.0
    %246 = vmatpush1.msra.mxu0 0.0
    %247 = vmatprep.subr.mxu0 0.0
    %248 = vmatpush1.msra.mxu0 0.0
    %249 = vmatprep.subr.mxu0 0.0
    %250 = vmatpush1.msra.mxu0 0.0
    %251 = vmatprep.subr.mxu0 0.0
    %252 = vmatpush1.msra.mxu0 0.0
    %253 = vmatprep.subr.mxu0 0.0
    %254 = vmatpush1.msra.mxu0 0.0
    %255 = vmatprep.subr.mxu0 0.0
    %256 = vmatpush1.msra.mxu0 0.0
    %257 = vmatprep.subr.mxu0 0.0
    %258 = vmatpush1.msra.mxu0 0.0
    %259 = vmatprep.subr.mxu0 0.0
    %260 = vmatpush1.msra.mxu0 0.0
    %261 = vmatprep.subr.mxu0 0.0
    %262 = vmatpush1.msra.mxu0 0.0
    %263 = vmatprep.subr.mxu0 0.0
    %264 = vmatpush1.msra.mxu0 0.0
    %265 = vmatprep.mubr.f32.mxu0 0.0
    %266 = vmatmul.mubr.f32.gmra.mrb[0].mxu0 %v190
    %v267 = vpop.f32.mrb[0].mxu0
    %v268 = vadd.f32 %v187, %v267
    %v269 = vpop.f32.mrb[0].mxu0
    %270 = vmatprep.mubr.f32.mxu0 0.0
    %271 = vmatmul.mubr.f32.gmra.mrb[0].mxu0 %v193
    %v272 = vpop.f32.mrb[0].mxu0
    %v273 = vadd.f32 %v187, %v272
    %v274 = vpop.f32.mrb[0].mxu0
    %275 = vmatprep.mubr.f32.mxu0 0.0
    %276 = vmatmul.mubr.f32.gmra.mrb[0].mxu0 %v196
    %v277 = vpop.f32.mrb[0].mxu0
    %v278 = vadd.f32 %v187, %v277
    %v279 = vpop.f32.mrb[0].mxu0
    %280 = vmatprep.mubr.f32.mxu0 0.0
    %281 = vmatmul.mubr.f32.gmra.mrb[0].mxu0 %v199
    %v282 = vpop.f32.mrb[0].mxu0
    %v283 = vadd.f32 %v187, %v282
    %v284 = vpop.f32.mrb[0].mxu0
    %285 = vdwg.mxu0
    %v288 = vunpack.c.l.s4 1966171168
    %v289 = vunpack.c.0.s8 %v288
    %v290 = vlaneseq
    %v291 = vshrl.u32 %v290, 7
    %v292 = vsub.s32 %v289, %v291
    %v293 = vrot.slane %v177, %v292
    %v294 = vcombine.high %v293, %v293
    %v296 = vunpack.c.l.s4 1966171168
    %v297 = vunpack.c.0.s8 %v296
    %v298 = vlaneseq
    %v299 = vshrl.u32 %v298, 7
    %v300 = vsub.s32 %v297, %v299
    %v301 = vrot.slane %v293, %v300
    %v303 = vunpack.c.l.s4 1966171168
    %v304 = vunpack.c.0.s8 %v303
    %v305 = vlaneseq
    %v306 = vshrl.u32 %v305, 7
    %v307 = vsub.s32 %v304, %v306
    %v308 = vrot.slane %v294, %v307
    %v309 = vlaneseq
    %v310 = vshrl.u32 %v309, 7
    %v311 = vsub.s32 0, %v310
    %v312 = vrot.slane %v301, %v311
    %v313 = vlaneseq
    %v314 = vshrl.u32 %v313, 7
    %v315 = vsub.s32 0, %v314
    %v316 = vrot.slane %v308, %v315
    %v319 = vmul.f32 %v268, %v312
    %v320 = vmul.f32 %v273, %v312
    %v321 = vmul.f32 %v278, %v316
    %v322 = vmul.f32 %v283, %v316
    %327 = vrot.lane.b32.xlu0 %v319, 112
    %v328 = vpop.permute.xlu0 %327
    %329 = vrot.lane.b32.xlu0 %v320, 112
    %v330 = vpop.permute.xlu0 %329
    %331 = vrot.lane.b32.xlu0 %v321, 112
    %v332 = vpop.permute.xlu0 %331
    %333 = vrot.lane.b32.xlu0 %v322, 112
    %v334 = vpop.permute.xlu0 %333
    %v339 = vadd.f32 %v319, %v328
    %v340 = vadd.f32 %v320, %v330
    %v341 = vadd.f32 %v321, %v332
    %v342 = vadd.f32 %v322, %v334
    %343 = vrot.lane.b32.xlu0 %v319, 96
    %v344 = vpop.permute.xlu0 %343
    %345 = vrot.lane.b32.xlu0 %v320, 96
    %v346 = vpop.permute.xlu0 %345
    %347 = vrot.lane.b32.xlu0 %v321, 96
    %v348 = vpop.permute.xlu0 %347
    %349 = vrot.lane.b32.xlu0 %v322, 96
    %v350 = vpop.permute.xlu0 %349
    %v355 = vadd.f32 %v339, %v344
    %v356 = vadd.f32 %v340, %v346
    %v357 = vadd.f32 %v341, %v348
    %v358 = vadd.f32 %v342, %v350
    %359 = vrot.lane.b32.xlu0 %v319, 80
    %v360 = vpop.permute.xlu0 %359
    %361 = vrot.lane.b32.xlu0 %v320, 80
    %v362 = vpop.permute.xlu0 %361
    %363 = vrot.lane.b32.xlu0 %v321, 80
    %v364 = vpop.permute.xlu0 %363
    %365 = vrot.lane.b32.xlu0 %v322, 80
    %v366 = vpop.permute.xlu0 %365
    %v371 = vadd.f32 %v355, %v360
    %v372 = vadd.f32 %v356, %v362
    %v373 = vadd.f32 %v357, %v364
    %v374 = vadd.f32 %v358, %v366
    %v375 = vmax.f32 %v371, 0.0
    %v376 = vmax.f32 %v372, 0.0
    %v377 = vmax.f32 %v373, 0.0
    %v378 = vmax.f32 %v374, 0.0
    %v379 = vrsqrt.pop %v375
    %v380 = vmul.f32 %v375, %v379
    %vm381 = vcmp.eq.f32.partialorder %v375, inf
    %v382 = vsel %vm381, %v375, %v380
    %vm383 = vcmp.eq.f32.partialorder %v375, 0.0
    %v384 = vand.u32 %v375, 2147483648
    %v385 = vsel %vm383, %v384, %v382
    %v386 = vrsqrt.pop %v376
    %v387 = vmul.f32 %v376, %v386
    %vm388 = vcmp.eq.f32.partialorder %v376, inf
    %v389 = vsel %vm388, %v376, %v387
    %vm390 = vcmp.eq.f32.partialorder %v376, 0.0
    %v391 = vand.u32 %v376, 2147483648
    %v392 = vsel %vm390, %v391, %v389
    %v393 = vrsqrt.pop %v377
    %v394 = vmul.f32 %v377, %v393
    %vm395 = vcmp.eq.f32.partialorder %v377, inf
    %v396 = vsel %vm395, %v377, %v394
    %vm397 = vcmp.eq.f32.partialorder %v377, 0.0
    %v398 = vand.u32 %v377, 2147483648
    %v399 = vsel %vm397, %v398, %v396
    %v400 = vrsqrt.pop %v378
    %v401 = vmul.f32 %v378, %v400
    %vm402 = vcmp.eq.f32.partialorder %v378, inf
    %v403 = vsel %vm402, %v378, %v401
    %vm404 = vcmp.eq.f32.partialorder %v378, 0.0
    %v405 = vand.u32 %v378, 2147483648
    %v406 = vsel %vm404, %v405, %v403
    %v407 = vsub.f32 0.0, %v371
    %v408 = vsub.f32 0.0, %v372
    %v409 = vsub.f32 0.0, %v373
    %v410 = vsub.f32 0.0, %v374
    %v411 = vmax.f32 %v407, 0.0
    %v412 = vmax.f32 %v408, 0.0
    %v413 = vmax.f32 %v409, 0.0
    %v414 = vmax.f32 %v410, 0.0
    %v415 = vrsqrt.pop %v411
    %v416 = vmul.f32 %v411, %v415
    %vm417 = vcmp.eq.f32.partialorder %v411, inf
    %v418 = vsel %vm417, %v411, %v416
    %vm419 = vcmp.eq.f32.partialorder %v411, 0.0
    %v420 = vand.u32 %v411, 2147483648
    %v421 = vsel %vm419, %v420, %v418
    %v422 = vrsqrt.pop %v412
    %v423 = vmul.f32 %v412, %v422
    %vm424 = vcmp.eq.f32.partialorder %v412, inf
    %v425 = vsel %vm424, %v412, %v423
    %vm426 = vcmp.eq.f32.partialorder %v412, 0.0
    %v427 = vand.u32 %v412, 2147483648
    %v428 = vsel %vm426, %v427, %v425
    %v429 = vrsqrt.pop %v413
    %v430 = vmul.f32 %v413, %v429
    %vm431 = vcmp.eq.f32.partialorder %v413, inf
    %v432 = vsel %vm431, %v413, %v430
    %vm433 = vcmp.eq.f32.partialorder %v413, 0.0
    %v434 = vand.u32 %v413, 2147483648
    %v435 = vsel %vm433, %v434, %v432
    %v436 = vrsqrt.pop %v414
    %v437 = vmul.f32 %v414, %v436
    %vm438 = vcmp.eq.f32.partialorder %v414, inf
    %v439 = vsel %vm438, %v414, %v437
    %vm440 = vcmp.eq.f32.partialorder %v414, 0.0
    %v441 = vand.u32 %v414, 2147483648
    %v442 = vsel %vm440, %v441, %v439
    %v443 = vsub.f32 %v385, %v421
    %v444 = vsub.f32 %v392, %v428
    %v445 = vsub.f32 %v399, %v435
    %v446 = vsub.f32 %v406, %v442
    %v447 = vmul.f32 %v443, %v443
    %v448 = vmul.f32 %v444, %v444
    %v449 = vmul.f32 %v445, %v445
    %v450 = vmul.f32 %v446, %v446
    %vm451 = vcmask 130048
    %v452 = vsel %vm451, %v447, 0.0
    %453 = vadd.xlane.f32.xlu0 %v452
    %v454 = vpop.xlane.xlu0 %453
    %v455 = vsel %vm451, %v448, 0.0
    %456 = vadd.xlane.f32.xlu0 %v455
    %v457 = vpop.xlane.xlu0 %456
    %v458 = vsel %vm451, %v449, 0.0
    %459 = vadd.xlane.f32.xlu0 %v458
    %v460 = vpop.xlane.xlu0 %459
    %v461 = vsel %vm451, %v450, 0.0
    %462 = vadd.xlane.f32.xlu0 %v461
    %v463 = vpop.xlane.xlu0 %462
    %v464 = vadd.f32 %v454, %v457
    %v465 = vrot.slane %v464, 4
    %v466 = vadd.f32 %v464, %v465
    %v467 = vrot.slane %v466, 2
    %v468 = vadd.f32 %v466, %v467
    %v469 = vrot.slane %v468, 1
    %v470 = vadd.f32 %v468, %v469
    %v471 = vadd.f32 %v460, %v463
    %v472 = vrot.slane %v471, 4
    %v473 = vadd.f32 %v471, %v472
    %v474 = vrot.slane %v473, 2
    %v475 = vadd.f32 %v473, %v474
    %v476 = vrot.slane %v475, 1
    %v477 = vadd.f32 %v475, %v476
    %v478 = vmax.f32 %v470, 1e-24
    %v479 = vmax.f32 %v477, 1e-24
    %v480 = vrsqrt.pop %v478
    %v481 = vrsqrt.pop %v479
    %v482 = vmul.f32 %v443, %v480
    %v483 = vmul.f32 %v444, %v480
    %v484 = vmul.f32 %v445, %v481
    %v485 = vmul.f32 %v446, %v481
    %v486 = vld [vmem:[%s4] sm:$0xff]
    %v487 = vld [vmem:[%s4 + $0x8] sm:$0xff]
    %v488 = vlaneseq
    %v489 = vshrl.u32 %v488, 7
    %v490 = vsub.s32 0, %v489
    %v491 = vrot.slane %v74, %v490
    %v493 = vsel %vm451, %v482, 0
    %v496 = vsel %vm451, %v483, 0
    %v499 = vsel %vm451, %v484, 0
    %v502 = vsel %vm451, %v485, 0
    %504 = vmatprep.subr.mxu0 0.0
    %505 = vmatpush1.msra.mxu0 %v486
    %506 = vmatprep.subr.mxu0 0.0
    %507 = vmatpush1.msra.mxu0 %v487
    %508 = vmatprep.subr.mxu0 0.0
    %509 = vmatpush1.msra.mxu0 0.0
    %510 = vmatprep.subr.mxu0 0.0
    %511 = vmatpush1.msra.mxu0 0.0
    %512 = vmatprep.subr.mxu0 0.0
    %513 = vmatpush1.msra.mxu0 0.0
    %514 = vmatprep.subr.mxu0 0.0
    %515 = vmatpush1.msra.mxu0 0.0
    %516 = vmatprep.subr.mxu0 0.0
    %517 = vmatpush1.msra.mxu0 0.0
    %518 = vmatprep.subr.mxu0 0.0
    %519 = vmatpush1.msra.mxu0 0.0
    %520 = vmatprep.subr.mxu0 0.0
    %521 = vmatpush1.msra.mxu0 0.0
    %522 = vmatprep.subr.mxu0 0.0
    %523 = vmatpush1.msra.mxu0 0.0
    %524 = vmatprep.subr.mxu0 0.0
    %525 = vmatpush1.msra.mxu0 0.0
    %526 = vmatprep.subr.mxu0 0.0
    %527 = vmatpush1.msra.mxu0 0.0
    %528 = vmatprep.subr.mxu0 0.0
    %529 = vmatpush1.msra.mxu0 0.0
    %530 = vmatprep.subr.mxu0 0.0
    %531 = vmatpush1.msra.mxu0 0.0
    %532 = vmatprep.subr.mxu0 0.0
    %533 = vmatpush1.msra.mxu0 0.0
    %534 = vmatprep.subr.mxu0 0.0
    %535 = vmatpush1.msra.mxu0 0.0
    %536 = vmatprep.subr.mxu0 0.0
    %537 = vmatpush1.msra.mxu0 0.0
    %538 = vmatprep.subr.mxu0 0.0
    %539 = vmatpush1.msra.mxu0 0.0
    %540 = vmatprep.subr.mxu0 0.0
    %541 = vmatpush1.msra.mxu0 0.0
    %542 = vmatprep.subr.mxu0 0.0
    %543 = vmatpush1.msra.mxu0 0.0
    %544 = vmatprep.subr.mxu0 0.0
    %545 = vmatpush1.msra.mxu0 0.0
    %546 = vmatprep.subr.mxu0 0.0
    %547 = vmatpush1.msra.mxu0 0.0
    %548 = vmatprep.subr.mxu0 0.0
    %549 = vmatpush1.msra.mxu0 0.0
    %550 = vmatprep.subr.mxu0 0.0
    %551 = vmatpush1.msra.mxu0 0.0
    %552 = vmatprep.subr.mxu0 0.0
    %553 = vmatpush1.msra.mxu0 0.0
    %554 = vmatprep.subr.mxu0 0.0
    %555 = vmatpush1.msra.mxu0 0.0
    %556 = vmatprep.subr.mxu0 0.0
    %557 = vmatpush1.msra.mxu0 0.0
    %558 = vmatprep.subr.mxu0 0.0
    %559 = vmatpush1.msra.mxu0 0.0
    %560 = vmatprep.subr.mxu0 0.0
    %561 = vmatpush1.msra.mxu0 0.0
    %562 = vmatprep.subr.mxu0 0.0
    %563 = vmatpush1.msra.mxu0 0.0
    %564 = vmatprep.subr.mxu0 0.0
    %565 = vmatpush1.msra.mxu0 0.0
    %566 = vmatprep.subr.mxu0 0.0
    %567 = vmatpush1.msra.mxu0 0.0
    %568 = vmatprep.mubr.f32.mxu0 0.0
    %569 = vmatmul.mubr.f32.gmra.mrb[0].mxu0 %v493
    %v570 = vpop.f32.mrb[0].mxu0
    %v571 = vadd.f32 %v491, %v570
    %v572 = vpop.f32.mrb[0].mxu0
    %573 = vmatprep.mubr.f32.mxu0 0.0
    %574 = vmatmul.mubr.f32.gmra.mrb[0].mxu0 %v496
    %v575 = vpop.f32.mrb[0].mxu0
    %v576 = vadd.f32 %v491, %v575
    %v577 = vpop.f32.mrb[0].mxu0
    %578 = vmatprep.mubr.f32.mxu0 0.0
    %579 = vmatmul.mubr.f32.gmra.mrb[0].mxu0 %v499
    %v580 = vpop.f32.mrb[0].mxu0
    %v581 = vadd.f32 %v491, %v580
    %v582 = vpop.f32.mrb[0].mxu0
    %583 = vmatprep.mubr.f32.mxu0 0.0
    %584 = vmatmul.mubr.f32.gmra.mrb[0].mxu0 %v502
    %v585 = vpop.f32.mrb[0].mxu0
    %v586 = vadd.f32 %v491, %v585
    %v587 = vpop.f32.mrb[0].mxu0
    %588 = vdwg.mxu0
    %v589 = vmax.f32 %v571, 0.0
    %v590 = vmax.f32 %v576, 0.0
    %v591 = vmax.f32 %v581, 0.0
    %v592 = vmax.f32 %v586, 0.0
    %v593 = vld [vmem:[%s5] sm:$0xff]
    %v594 = vld [vmem:[%s5 + $0x8] sm:$0xff]
    %v595 = vld [vmem:[%s5 + $0x10] sm:$0xff]
    %v596 = vld [vmem:[%s5 + $0x18] sm:$0xff]
    %v597 = vlaneseq
    %v598 = vshrl.u32 %v597, 7
    %v599 = vsub.s32 0, %v598
    %v600 = vrot.slane %v75, %v599
    %v602 = vsel %vm188, %v589, 0
    %v605 = vsel %vm188, %v590, 0
    %v608 = vsel %vm188, %v591, 0
    %v611 = vsel %vm188, %v592, 0
    %613 = vmatprep.subr.mxu0 0.0
    %614 = vmatpush1.msra.mxu0 %v593
    %615 = vmatprep.subr.mxu0 0.0
    %616 = vmatpush1.msra.mxu0 %v594
    %617 = vmatprep.subr.mxu0 0.0
    %618 = vmatpush1.msra.mxu0 %v595
    %619 = vmatprep.subr.mxu0 0.0
    %620 = vmatpush1.msra.mxu0 %v596
    %621 = vmatprep.subr.mxu0 0.0
    %622 = vmatpush1.msra.mxu0 0.0
    %623 = vmatprep.subr.mxu0 0.0
    %624 = vmatpush1.msra.mxu0 0.0
    %625 = vmatprep.subr.mxu0 0.0
    %626 = vmatpush1.msra.mxu0 0.0
    %627 = vmatprep.subr.mxu0 0.0
    %628 = vmatpush1.msra.mxu0 0.0
    %629 = vmatprep.subr.mxu0 0.0
    %630 = vmatpush1.msra.mxu0 0.0
    %631 = vmatprep.subr.mxu0 0.0
    %632 = vmatpush1.msra.mxu0 0.0
    %633 = vmatprep.subr.mxu0 0.0
    %634 = vmatpush1.msra.mxu0 0.0
    %635 = vmatprep.subr.mxu0 0.0
    %636 = vmatpush1.msra.mxu0 0.0
    %637 = vmatprep.subr.mxu0 0.0
    %638 = vmatpush1.msra.mxu0 0.0
    %639 = vmatprep.subr.mxu0 0.0
    %640 = vmatpush1.msra.mxu0 0.0
    %641 = vmatprep.subr.mxu0 0.0
    %642 = vmatpush1.msra.mxu0 0.0
    %643 = vmatprep.subr.mxu0 0.0
    %644 = vmatpush1.msra.mxu0 0.0
    %645 = vmatprep.subr.mxu0 0.0
    %646 = vmatpush1.msra.mxu0 0.0
    %647 = vmatprep.subr.mxu0 0.0
    %648 = vmatpush1.msra.mxu0 0.0
    %649 = vmatprep.subr.mxu0 0.0
    %650 = vmatpush1.msra.mxu0 0.0
    %651 = vmatprep.subr.mxu0 0.0
    %652 = vmatpush1.msra.mxu0 0.0
    %653 = vmatprep.subr.mxu0 0.0
    %654 = vmatpush1.msra.mxu0 0.0
    %655 = vmatprep.subr.mxu0 0.0
    %656 = vmatpush1.msra.mxu0 0.0
    %657 = vmatprep.subr.mxu0 0.0
    %658 = vmatpush1.msra.mxu0 0.0
    %659 = vmatprep.subr.mxu0 0.0
    %660 = vmatpush1.msra.mxu0 0.0
    %661 = vmatprep.subr.mxu0 0.0
    %662 = vmatpush1.msra.mxu0 0.0
    %663 = vmatprep.subr.mxu0 0.0
    %664 = vmatpush1.msra.mxu0 0.0
    %665 = vmatprep.subr.mxu0 0.0
    %666 = vmatpush1.msra.mxu0 0.0
    %667 = vmatprep.subr.mxu0 0.0
    %668 = vmatpush1.msra.mxu0 0.0
    %669 = vmatprep.subr.mxu0 0.0
    %670 = vmatpush1.msra.mxu0 0.0
    %671 = vmatprep.subr.mxu0 0.0
    %672 = vmatpush1.msra.mxu0 0.0
    %673 = vmatprep.subr.mxu0 0.0
    %674 = vmatpush1.msra.mxu0 0.0
    %675 = vmatprep.subr.mxu0 0.0
    %676 = vmatpush1.msra.mxu0 0.0
    %677 = vmatprep.mubr.f32.mxu0 0.0
    %678 = vmatmul.mubr.f32.gmra.mrb[0].mxu0 %v602
    %v679 = vpop.f32.mrb[0].mxu0
    %v680 = vadd.f32 %v600, %v679
    %v681 = vpop.f32.mrb[0].mxu0
    %682 = vmatprep.mubr.f32.mxu0 0.0
    %683 = vmatmul.mubr.f32.gmra.mrb[0].mxu0 %v605
    %v684 = vpop.f32.mrb[0].mxu0
    %v685 = vadd.f32 %v600, %v684
    %v686 = vpop.f32.mrb[0].mxu0
    %687 = vmatprep.mubr.f32.mxu0 0.0
    %688 = vmatmul.mubr.f32.gmra.mrb[0].mxu0 %v608
    %v689 = vpop.f32.mrb[0].mxu0
    %v690 = vadd.f32 %v600, %v689
    %v691 = vpop.f32.mrb[0].mxu0
    %692 = vmatprep.mubr.f32.mxu0 0.0
    %693 = vmatmul.mubr.f32.gmra.mrb[0].mxu0 %v611
    %v694 = vpop.f32.mrb[0].mxu0
    %v695 = vadd.f32 %v600, %v694
    %v696 = vpop.f32.mrb[0].mxu0
    %697 = vdwg.mxu0
    %698 = vxpose.xlu0.b32.start [1/16] %v680, 128
    %699 = vxpose.xlu0.b32.cont [2/16] %v685, 128
    %700 = vxpose.xlu0.b32.cont [3/16] 0.0, 128
    %701 = vxpose.xlu0.b32.cont [4/16] 0.0, 128
    %702 = vxpose.xlu0.b32.cont [5/16] 0.0, 128
    %703 = vxpose.xlu0.b32.cont [6/16] 0.0, 128
    %704 = vxpose.xlu0.b32.cont [7/16] 0.0, 128
    %705 = vxpose.xlu0.b32.cont [8/16] 0.0, 128
    %706 = vxpose.xlu0.b32.cont [9/16] 0.0, 128
    %707 = vxpose.xlu0.b32.cont [10/16] 0.0, 128
    %708 = vxpose.xlu0.b32.cont [11/16] 0.0, 128
    %709 = vxpose.xlu0.b32.cont [12/16] 0.0, 128
    %710 = vxpose.xlu0.b32.cont [13/16] 0.0, 128
    %711 = vxpose.xlu0.b32.cont [14/16] 0.0, 128
    %712 = vxpose.xlu0.b32.cont [15/16] 0.0, 128
    %713 = vxpose.xlu0.b32.end [16/16] 0.0, 128
    %v714 = vpop.trf.xlu0
    %v715 = vpop.trf.xlu0
    %v716 = vpop.trf.xlu0
    %v717 = vpop.trf.xlu0
    %v718 = vpop.trf.xlu0
    %v719 = vpop.trf.xlu0
    %v720 = vpop.trf.xlu0
    %v721 = vpop.trf.xlu0
    %v722 = vpop.trf.xlu0
    %v723 = vpop.trf.xlu0
    %v724 = vpop.trf.xlu0
    %v725 = vpop.trf.xlu0
    %v726 = vpop.trf.xlu0
    %v727 = vpop.trf.xlu0
    %v728 = vpop.trf.xlu0
    %v729 = vpop.trf.xlu0
    %730 = vxpose.xlu0.b32.start [1/16] %v690, 128
    %731 = vxpose.xlu0.b32.cont [2/16] %v695, 128
    %732 = vxpose.xlu0.b32.cont [3/16] 0.0, 128
    %733 = vxpose.xlu0.b32.cont [4/16] 0.0, 128
    %734 = vxpose.xlu0.b32.cont [5/16] 0.0, 128
    %735 = vxpose.xlu0.b32.cont [6/16] 0.0, 128
    %736 = vxpose.xlu0.b32.cont [7/16] 0.0, 128
    %737 = vxpose.xlu0.b32.cont [8/16] 0.0, 128
    %738 = vxpose.xlu0.b32.cont [9/16] 0.0, 128
    %739 = vxpose.xlu0.b32.cont [10/16] 0.0, 128
    %740 = vxpose.xlu0.b32.cont [11/16] 0.0, 128
    %741 = vxpose.xlu0.b32.cont [12/16] 0.0, 128
    %742 = vxpose.xlu0.b32.cont [13/16] 0.0, 128
    %743 = vxpose.xlu0.b32.cont [14/16] 0.0, 128
    %744 = vxpose.xlu0.b32.cont [15/16] 0.0, 128
    %745 = vxpose.xlu0.b32.end [16/16] 0.0, 128
    %v746 = vpop.trf.xlu0
    %v747 = vpop.trf.xlu0
    %v748 = vpop.trf.xlu0
    %v749 = vpop.trf.xlu0
    %v750 = vpop.trf.xlu0
    %v751 = vpop.trf.xlu0
    %v752 = vpop.trf.xlu0
    %v753 = vpop.trf.xlu0
    %v754 = vpop.trf.xlu0
    %v755 = vpop.trf.xlu0
    %v756 = vpop.trf.xlu0
    %v757 = vpop.trf.xlu0
    %v758 = vpop.trf.xlu0
    %v759 = vpop.trf.xlu0
    %v760 = vpop.trf.xlu0
    %v761 = vpop.trf.xlu0
    %vm762 = vcmask 123904
    %v763 = vsel %vm762, %v714, -inf
    %764 = vmax.xlane.f32.xlu0 %v763
    %v765 = vpop.xlane.xlu0 %764
    %v766 = vsel %vm762, %v746, -inf
    %767 = vmax.xlane.f32.xlu0 %v766
    %v768 = vpop.xlane.xlu0 %767
    %v769 = vsub.f32 %v714, %v765
    %v770 = vsub.f32 %v746, %v768
    %v771 = vmul.f32 %v769, 1.442695
    %v772 = vpow.pop %v771
    %v773 = vmul.f32 %v770, 1.442695
    %v774 = vpow.pop %v773
    %v775 = vsel %vm762, %v772, 0.0
    %776 = vadd.xlane.f32.xlu0 %v775
    %v777 = vpop.xlane.xlu0 %776
    %v778 = vsel %vm762, %v774, 0.0
    %779 = vadd.xlane.f32.xlu0 %v778
    %v780 = vpop.xlane.xlu0 %779
    %v781 = vrcp.pop %v777
    %v782 = vmul.f32 %v772, %v781
    %v783 = vrcp.pop %v780
    %v784 = vmul.f32 %v774, %v783
    %v786 = vsel %vm451, %v782, 0
    %788 = vmatprep.subr.mxu0 0.0
    %789 = vmatpush1.msra.mxu0 %v68
    %790 = vmatprep.subr.mxu0 0.0
    %791 = vmatpush1.msra.mxu0 %v69
    %792 = vmatprep.subr.mxu0 0.0
    %793 = vmatpush1.msra.mxu0 0.0
    %794 = vmatprep.subr.mxu0 0.0
    %795 = vmatpush1.msra.mxu0 0.0
    %796 = vmatprep.subr.mxu0 0.0
    %797 = vmatpush1.msra.mxu0 0.0
    %798 = vmatprep.subr.mxu0 0.0
    %799 = vmatpush1.msra.mxu0 0.0
    %800 = vmatprep.subr.mxu0 0.0
    %801 = vmatpush1.msra.mxu0 0.0
    %802 = vmatprep.subr.mxu0 0.0
    %803 = vmatpush1.msra.mxu0 0.0
    %804 = vmatprep.subr.mxu0 0.0
    %805 = vmatpush1.msra.mxu0 0.0
    %806 = vmatprep.subr.mxu0 0.0
    %807 = vmatpush1.msra.mxu0 0.0
    %808 = vmatprep.subr.mxu0 0.0
    %809 = vmatpush1.msra.mxu0 0.0
    %810 = vmatprep.subr.mxu0 0.0
    %811 = vmatpush1.msra.mxu0 0.0
    %812 = vmatprep.subr.mxu0 0.0
    %813 = vmatpush1.msra.mxu0 0.0
    %814 = vmatprep.subr.mxu0 0.0
    %815 = vmatpush1.msra.mxu0 0.0
    %816 = vmatprep.subr.mxu0 0.0
    %817 = vmatpush1.msra.mxu0 0.0
    %818 = vmatprep.subr.mxu0 0.0
    %819 = vmatpush1.msra.mxu0 0.0
    %820 = vmatprep.subr.mxu0 0.0
    %821 = vmatpush1.msra.mxu0 0.0
    %822 = vmatprep.subr.mxu0 0.0
    %823 = vmatpush1.msra.mxu0 0.0
    %824 = vmatprep.subr.mxu0 0.0
    %825 = vmatpush1.msra.mxu0 0.0
    %826 = vmatprep.subr.mxu0 0.0
    %827 = vmatpush1.msra.mxu0 0.0
    %828 = vmatprep.subr.mxu0 0.0
    %829 = vmatpush1.msra.mxu0 0.0
    %830 = vmatprep.subr.mxu0 0.0
    %831 = vmatpush1.msra.mxu0 0.0
    %832 = vmatprep.subr.mxu0 0.0
    %833 = vmatpush1.msra.mxu0 0.0
    %834 = vmatprep.subr.mxu0 0.0
    %835 = vmatpush1.msra.mxu0 0.0
    %836 = vmatprep.subr.mxu0 0.0
    %837 = vmatpush1.msra.mxu0 0.0
    %838 = vmatprep.subr.mxu0 0.0
    %839 = vmatpush1.msra.mxu0 0.0
    %840 = vmatprep.subr.mxu0 0.0
    %841 = vmatpush1.msra.mxu0 0.0
    %842 = vmatprep.subr.mxu0 0.0
    %843 = vmatpush1.msra.mxu0 0.0
    %844 = vmatprep.subr.mxu0 0.0
    %845 = vmatpush1.msra.mxu0 0.0
    %846 = vmatprep.subr.mxu0 0.0
    %847 = vmatpush1.msra.mxu0 0.0
    %848 = vmatprep.subr.mxu0 0.0
    %849 = vmatpush1.msra.mxu0 0.0
    %850 = vmatprep.subr.mxu0 0.0
    %851 = vmatpush1.msra.mxu0 0.0
    %852 = vmatprep.mubr.f32.mxu0 0.0
    %853 = vmatmul.mubr.f32.gmra.mrb[0].mxu0 %v786
    %v854 = vpop.f32.mrb[0].mxu0
    %v855 = vadd.f32 0.0, %v854
    %v856 = vpop.f32.mrb[0].mxu0
    %857 = vdwg.mxu0
    %v859 = vsel %vm451, %v784, 0
    %861 = vmatprep.subr.mxu0 0.0
    %862 = vmatpush1.msra.mxu0 %v70
    %863 = vmatprep.subr.mxu0 0.0
    %864 = vmatpush1.msra.mxu0 %v71
    %865 = vmatprep.subr.mxu0 0.0
    %866 = vmatpush1.msra.mxu0 0.0
    %867 = vmatprep.subr.mxu0 0.0
    %868 = vmatpush1.msra.mxu0 0.0
    %869 = vmatprep.subr.mxu0 0.0
    %870 = vmatpush1.msra.mxu0 0.0
    %871 = vmatprep.subr.mxu0 0.0
    %872 = vmatpush1.msra.mxu0 0.0
    %873 = vmatprep.subr.mxu0 0.0
    %874 = vmatpush1.msra.mxu0 0.0
    %875 = vmatprep.subr.mxu0 0.0
    %876 = vmatpush1.msra.mxu0 0.0
    %877 = vmatprep.subr.mxu0 0.0
    %878 = vmatpush1.msra.mxu0 0.0
    %879 = vmatprep.subr.mxu0 0.0
    %880 = vmatpush1.msra.mxu0 0.0
    %881 = vmatprep.subr.mxu0 0.0
    %882 = vmatpush1.msra.mxu0 0.0
    %883 = vmatprep.subr.mxu0 0.0
    %884 = vmatpush1.msra.mxu0 0.0
    %885 = vmatprep.subr.mxu0 0.0
    %886 = vmatpush1.msra.mxu0 0.0
    %887 = vmatprep.subr.mxu0 0.0
    %888 = vmatpush1.msra.mxu0 0.0
    %889 = vmatprep.subr.mxu0 0.0
    %890 = vmatpush1.msra.mxu0 0.0
    %891 = vmatprep.subr.mxu0 0.0
    %892 = vmatpush1.msra.mxu0 0.0
    %893 = vmatprep.subr.mxu0 0.0
    %894 = vmatpush1.msra.mxu0 0.0
    %895 = vmatprep.subr.mxu0 0.0
    %896 = vmatpush1.msra.mxu0 0.0
    %897 = vmatprep.subr.mxu0 0.0
    %898 = vmatpush1.msra.mxu0 0.0
    %899 = vmatprep.subr.mxu0 0.0
    %900 = vmatpush1.msra.mxu0 0.0
    %901 = vmatprep.subr.mxu0 0.0
    %902 = vmatpush1.msra.mxu0 0.0
    %903 = vmatprep.subr.mxu0 0.0
    %904 = vmatpush1.msra.mxu0 0.0
    %905 = vmatprep.subr.mxu0 0.0
    %906 = vmatpush1.msra.mxu0 0.0
    %907 = vmatprep.subr.mxu0 0.0
    %908 = vmatpush1.msra.mxu0 0.0
    %909 = vmatprep.subr.mxu0 0.0
    %910 = vmatpush1.msra.mxu0 0.0
    %911 = vmatprep.subr.mxu0 0.0
    %912 = vmatpush1.msra.mxu0 0.0
    %913 = vmatprep.subr.mxu0 0.0
    %914 = vmatpush1.msra.mxu0 0.0
    %915 = vmatprep.subr.mxu0 0.0
    %916 = vmatpush1.msra.mxu0 0.0
    %917 = vmatprep.subr.mxu0 0.0
    %918 = vmatpush1.msra.mxu0 0.0
    %919 = vmatprep.subr.mxu0 0.0
    %920 = vmatpush1.msra.mxu0 0.0
    %921 = vmatprep.subr.mxu0 0.0
    %922 = vmatpush1.msra.mxu0 0.0
    %923 = vmatprep.subr.mxu0 0.0
    %924 = vmatpush1.msra.mxu0 0.0
    %925 = vmatprep.mubr.f32.mxu0 0.0
    %926 = vmatmul.mubr.f32.gmra.mrb[0].mxu0 %v859
    %v927 = vpop.f32.mrb[0].mxu0
    %v928 = vadd.f32 0.0, %v927
    %v929 = vpop.f32.mrb[0].mxu0
    %930 = vdwg.mxu0
    %vm931 = vcmask 254976
    %932 = vst.msk [vmem:[#allocation8] sm:$0x3] %vm931, %v855
    %933 = vst.msk [vmem:[#allocation8 + $0x2] sm:$0x3] %vm931, %v928
    // Predicated region
    $region42: #{tpu_custom_call.1} parent=1 // pred_check
      _
    $region43: #{tpu_custom_call.1} parent=1 // pred_check_branch
      %935 = sbr.rel (0) target = $region45
    $region44: #{tpu_custom_call.1} parent=1 // pred_region
      %s937 = ssub.s32 64, 64
      %938 = vsyncadd [#allocation4], %s937
      %s939 = sshll.u32 [#allocation8], 4
      %s940 = int_to_ptr.vmem [resolvable:$true] %s939
      %945 = dma.vmem_to_hbm [thread:$0]  %s940, 64, %s7, [#allocation4], 32, 32, 2
    $region45: #{tpu_custom_call.1} parent=1 // pred_fallthru
      _
    // Predicated region
    $region46: #{tpu_custom_call.1} parent=1 // pred_check
      _
    $region47: #{tpu_custom_call.1} parent=1 // pred_check_branch
      %947 = sbr.rel (0) target = $region49
    $region48: #{tpu_custom_call.1} parent=1 // pred_region
      %948 = dma.done [#allocation4], 64
    $region49: #{tpu_custom_call.1} parent=1 // pred_fallthru
      _
    %949 = vsyncpa [#allocation3], 1
    %950 = vsyncpa [#allocation6], 1
    %951 = vsyncpa [#allocation4], 1

// kernel: tpu_custom_call.1
$region0: #{tpu_custom_call.1}
  #allocation0 [shape = 'u32[]', space=smem, size = 0x4, offset = 0x4, fixed_abs, tag = 'smem constant byte address 0x4 - core index']
  #allocation1 [shape = 'u32[144,128]{1,0:T(1,128)}', space=vmem, size = 0x12000, scoped, tag = 'internal scratch']
  %s0 = inlined_call_operand.vmem [shape: f32[2,16,32], index: 0, kind: input, shape index: {}]
  %s1 = inlined_call_operand.hbm [shape: f32[2,1,64], index: 1, kind: input, shape index: {}]
  %s2 = inlined_call_operand.hbm [shape: f32[64,64], index: 2, kind: input, shape index: {}]
  %s3 = inlined_call_operand.hbm [shape: f32[32,64], index: 3, kind: input, shape index: {}]
  %s4 = inlined_call_operand.vmem [shape: f32[16,32], index: 4, kind: input, shape index: {}]
  %s5 = inlined_call_operand.vmem [shape: f32[32,2], index: 5, kind: input, shape index: {}]
  %s6 = inlined_call_operand.vmem [shape: f32[4,64], index: 6, kind: input, shape index: {}]
  %s7 = inlined_call_operand.hbm [shape: f32[2,2,32], index: 7, kind: output, shape index: {}]
  %s8 = sld [smem:[#allocation0]]
  $region50: #{tpu_custom_call.1} parent=0
    _
  %s10 = ssub.s32 1, %s8
  %s11 = scalar_select 0, %s10, %s8
  $region1: #{tpu_custom_call.1} parent=0
    #allocation2 [shape = 'u8[1024]{0}', space=vmem, size = 0x400, scoped, tag = 'input window, operand 1, single buffered']
    #allocation3 [shape = 's32[1]{0}', space=sflag, size = 0x4, scoped, tag = 'scoped memory for tpu_custom_call.1']
    #allocation4 [shape = 's32[1]{0}', space=sflag, size = 0x4, scoped, tag = 'scoped memory for tpu_custom_call.1']
    #allocation5 [shape = 'u8[32768]{0}', space=vmem, size = 0x8000, scoped, tag = 'input window, operand 2, single buffered']
    #allocation6 [shape = 's32[1]{0}', space=sflag, size = 0x4, scoped, tag = 'scoped memory for tpu_custom_call.1']
    #allocation7 [shape = 'u8[16384]{0}', space=vmem, size = 0x4000, scoped, tag = 'input window, operand 3, single buffered']
    #allocation8 [shape = 'u8[2048]{0}', space=vmem, size = 0x800, scoped, tag = 'output window, operand 0, single buffered']
    %12 = vsyncpa [#allocation3], 0
    %13 = vsyncpa [#allocation6], 0
    %14 = vsyncpa [#allocation4], 0
    // Predicated region
    $region2: #{tpu_custom_call.1} parent=1 // pred_check
      _
    $region3: #{tpu_custom_call.1} parent=1 // pred_check_branch
      %16 = sbr.rel (0) target = $region5
    $region4: #{tpu_custom_call.1} parent=1 // pred_region
      _
    $region5: #{tpu_custom_call.1} parent=1 // pred_fallthru
      _
    // Predicated region
    $region6: #{tpu_custom_call.1} parent=1 // pred_check
      _
    $region7: #{tpu_custom_call.1} parent=1 // pred_check_branch
      %18 = sbr.rel (0) target = $region9
    $region8: #{tpu_custom_call.1} parent=1 // pred_region
      %s20 = ssub.s32 32, 32
      %21 = vsyncadd [#allocation3], %s20
      %s22 = sshll.u32 [#allocation2], 4
      %s23 = int_to_ptr.vmem [resolvable:$true] %s22
      %28 = dma.hbm_to_vmem [thread:$0]  %s1, 32, %s23, [#allocation3], 16, 16, 1
    $region9: #{tpu_custom_call.1} parent=1 // pred_fallthru
      _
    // Predicated region
    $region10: #{tpu_custom_call.1} parent=1 // pred_check
      _
    $region11: #{tpu_custom_call.1} parent=1 // pred_check_branch
      %30 = sbr.rel (0) target = $region13
    $region12: #{tpu_custom_call.1} parent=1 // pred_region
      %s32 = ssub.s32 1024, 1024
      %33 = vsyncadd [#allocation6], %s32
      %s34 = sshll.u32 [#allocation5], 4
      %s35 = int_to_ptr.vmem [resolvable:$true] %s34
      %40 = dma.hbm_to_vmem [thread:$0]  %s2, 1024, %s35, [#allocation6], 128, 128, 8
    $region13: #{tpu_custom_call.1} parent=1 // pred_fallthru
      _
    // Predicated region
    $region14: #{tpu_custom_call.1} parent=1 // pred_check
      _
    $region15: #{tpu_custom_call.1} parent=1 // pred_check_branch
      %42 = sbr.rel (0) target = $region17
    $region16: #{tpu_custom_call.1} parent=1 // pred_region
      %s44 = ssub.s32 512, 512
      %45 = vsyncadd [#allocation6], %s44
      %s46 = sshll.u32 [#allocation7], 4
      %s47 = int_to_ptr.vmem [resolvable:$true] %s46
      %52 = dma.hbm_to_vmem [thread:$0]  %s3, 512, %s47, [#allocation6], 128, 128, 8
    $region17: #{tpu_custom_call.1} parent=1 // pred_fallthru
      _
    // Predicated region
    $region18: #{tpu_custom_call.1} parent=1 // pred_check
      _
    $region19: #{tpu_custom_call.1} parent=1 // pred_check_branch
      %54 = sbr.rel (0) target = $region21
    $region20: #{tpu_custom_call.1} parent=1 // pred_region
      _
    $region21: #{tpu_custom_call.1} parent=1 // pred_fallthru
      _
    // Predicated region
    $region22: #{tpu_custom_call.1} parent=1 // pred_check
      _
    $region23: #{tpu_custom_call.1} parent=1 // pred_check_branch
      %56 = sbr.rel (0) target = $region25
    $region24: #{tpu_custom_call.1} parent=1 // pred_region
      _
    $region25: #{tpu_custom_call.1} parent=1 // pred_fallthru
      _
    // Predicated region
    $region26: #{tpu_custom_call.1} parent=1 // pred_check
      _
    $region27: #{tpu_custom_call.1} parent=1 // pred_check_branch
      %58 = sbr.rel (0) target = $region29
    $region28: #{tpu_custom_call.1} parent=1 // pred_region
      _
    $region29: #{tpu_custom_call.1} parent=1 // pred_fallthru
      _
    // Predicated region
    $region30: #{tpu_custom_call.1} parent=1 // pred_check
      _
    $region31: #{tpu_custom_call.1} parent=1 // pred_check_branch
      %60 = sbr.rel (0) target = $region33
    $region32: #{tpu_custom_call.1} parent=1 // pred_region
      %61 = dma.done [#allocation3], 32
    $region33: #{tpu_custom_call.1} parent=1 // pred_fallthru
      _
    // Predicated region
    $region34: #{tpu_custom_call.1} parent=1 // pred_check
      _
    $region35: #{tpu_custom_call.1} parent=1 // pred_check_branch
      %63 = sbr.rel (0) target = $region37
    $region36: #{tpu_custom_call.1} parent=1 // pred_region
      %64 = dma.done [#allocation6], 1024
    $region37: #{tpu_custom_call.1} parent=1 // pred_fallthru
      _
    // Predicated region
    $region38: #{tpu_custom_call.1} parent=1 // pred_check
      _
    $region39: #{tpu_custom_call.1} parent=1 // pred_check_branch
      %66 = sbr.rel (0) target = $region41
    $region40: #{tpu_custom_call.1} parent=1 // pred_region
      %67 = dma.done [#allocation6], 512
    $region41: #{tpu_custom_call.1} parent=1 // pred_fallthru
      _
    %v68 = vld [vmem:[%s0] sm:$0xff]
    %v69 = vld [vmem:[%s0 + $0x8] sm:$0xff]
    %v70 = vld [vmem:[%s0 + $0x10] sm:$0xff]
    %v71 = vld [vmem:[%s0 + $0x18] sm:$0xff]
    %v72 = vld [vmem:[%s6] sm:$0x1]
    %v73 = vld [vmem:[%s6 + $0x1] sm:$0x1]
    %v74 = vld [vmem:[%s6 + $0x2] sm:$0x1]
    %v75 = vld [vmem:[%s6 + $0x3] sm:$0x1]
    %v76 = vld [vmem:[#allocation2] sm:$0x1]
    %v77 = vld [vmem:[#allocation2 + $0x1] sm:$0x1]
    %v78 = vld [vmem:[#allocation5] sm:$0xff]
    %v79 = vld [vmem:[#allocation5 + $0x8] sm:$0xff]
    %v80 = vld [vmem:[#allocation5 + $0x10] sm:$0xff]
    %v81 = vld [vmem:[#allocation5 + $0x18] sm:$0xff]
    %v82 = vld [vmem:[#allocation5 + $0x20] sm:$0xff]
    %v83 = vld [vmem:[#allocation5 + $0x28] sm:$0xff]
    %v84 = vld [vmem:[#allocation5 + $0x30] sm:$0xff]
    %v85 = vld [vmem:[#allocation5 + $0x38] sm:$0xff]
    %v86 = vlaneseq
    %v87 = vshrl.u32 %v86, 7
    %v88 = vsub.s32 0, %v87
    %v89 = vrot.slane %v72, %v88
    %v92 = vcombine.low %v76, %v77
    %v94 = vunpack.c.l.s4 1966171168
    %v95 = vunpack.c.0.s8 %v94
    %v96 = vlaneseq
    %v97 = vshrl.u32 %v96, 7
    %v98 = vsub.s32 %v95, %v97
    %v99 = vrot.slane %v92, %v98
    %v101 = vunpack.c.l.s4 1966171168
    %v102 = vunpack.c.0.s8 %v101
    %v103 = vlaneseq
    %v104 = vshrl.u32 %v103, 7
    %v105 = vsub.s32 %v102, %v104
    %v106 = vrot.slane %v99, %v105
    %vm107 = vcmask 523264
    %v108 = vsel %vm107, %v106, 0
    %110 = vmatprep.subr.mxu0 0.0
    %111 = vmatpush1.msra.mxu0 %v78
    %112 = vmatprep.subr.mxu0 0.0
    %113 = vmatpush1.msra.mxu0 %v79
    %114 = vmatprep.subr.mxu0 0.0
    %115 = vmatpush1.msra.mxu0 %v80
    %116 = vmatprep.subr.mxu0 0.0
    %117 = vmatpush1.msra.mxu0 %v81
    %118 = vmatprep.subr.mxu0 0.0
    %119 = vmatpush1.msra.mxu0 %v82
    %120 = vmatprep.subr.mxu0 0.0
    %121 = vmatpush1.msra.mxu0 %v83
    %122 = vmatprep.subr.mxu0 0.0
    %123 = vmatpush1.msra.mxu0 %v84
    %124 = vmatprep.subr.mxu0 0.0
    %125 = vmatpush1.msra.mxu0 %v85
    %126 = vmatprep.subr.mxu0 0.0
    %127 = vmatpush1.msra.mxu0 0.0
    %128 = vmatprep.subr.mxu0 0.0
    %129 = vmatpush1.msra.mxu0 0.0
    %130 = vmatprep.subr.mxu0 0.0
    %131 = vmatpush1.msra.mxu0 0.0
    %132 = vmatprep.subr.mxu0 0.0
    %133 = vmatpush1.msra.mxu0 0.0
    %134 = vmatprep.subr.mxu0 0.0
    %135 = vmatpush1.msra.mxu0 0.0
    %136 = vmatprep.subr.mxu0 0.0
    %137 = vmatpush1.msra.mxu0 0.0
    %138 = vmatprep.subr.mxu0 0.0
    %139 = vmatpush1.msra.mxu0 0.0
    %140 = vmatprep.subr.mxu0 0.0
    %141 = vmatpush1.msra.mxu0 0.0
    %142 = vmatprep.subr.mxu0 0.0
    %143 = vmatpush1.msra.mxu0 0.0
    %144 = vmatprep.subr.mxu0 0.0
    %145 = vmatpush1.msra.mxu0 0.0
    %146 = vmatprep.subr.mxu0 0.0
    %147 = vmatpush1.msra.mxu0 0.0
    %148 = vmatprep.subr.mxu0 0.0
    %149 = vmatpush1.msra.mxu0 0.0
    %150 = vmatprep.subr.mxu0 0.0
    %151 = vmatpush1.msra.mxu0 0.0
    %152 = vmatprep.subr.mxu0 0.0
    %153 = vmatpush1.msra.mxu0 0.0
    %154 = vmatprep.subr.mxu0 0.0
    %155 = vmatpush1.msra.mxu0 0.0
    %156 = vmatprep.subr.mxu0 0.0
    %157 = vmatpush1.msra.mxu0 0.0
    %158 = vmatprep.subr.mxu0 0.0
    %159 = vmatpush1.msra.mxu0 0.0
    %160 = vmatprep.subr.mxu0 0.0
    %161 = vmatpush1.msra.mxu0 0.0
    %162 = vmatprep.subr.mxu0 0.0
    %163 = vmatpush1.msra.mxu0 0.0
    %164 = vmatprep.subr.mxu0 0.0
    %165 = vmatpush1.msra.mxu0 0.0
    %166 = vmatprep.subr.mxu0 0.0
    %167 = vmatpush1.msra.mxu0 0.0
    %168 = vmatprep.subr.mxu0 0.0
    %169 = vmatpush1.msra.mxu0 0.0
    %170 = vmatprep.subr.mxu0 0.0
    %171 = vmatpush1.msra.mxu0 0.0
    %172 = vmatprep.subr.mxu0 0.0
    %173 = vmatpush1.msra.mxu0 0.0
    %174 = vmatprep.mubr.f32.mxu0 0.0
    %175 = vmatmul.mubr.f32.gmra.mrb[0].mxu0 %v108
    %v176 = vpop.f32.mrb[0].mxu0
    %v177 = vadd.f32 %v89, %v176
    %v178 = vpop.f32.mrb[0].mxu0
    %179 = vdwg.mxu0
    %v180 = vld [vmem:[#allocation7] sm:$0xff]
    %v181 = vld [vmem:[#allocation7 + $0x8] sm:$0xff]
    %v182 = vld [vmem:[#allocation7 + $0x10] sm:$0xff]
    %v183 = vld [vmem:[#allocation7 + $0x18] sm:$0xff]
    %v184 = vlaneseq
    %v185 = vshrl.u32 %v184, 7
    %v186 = vsub.s32 0, %v185
    %v187 = vrot.slane %v73, %v186
    %vm188 = vcmask 261120
    %v190 = vsel %vm188, %v68, 0
    %v193 = vsel %vm188, %v69, 0
    %v196 = vsel %vm188, %v70, 0
    %v199 = vsel %vm188, %v71, 0
    %201 = vmatprep.subr.mxu0 0.0
    %202 = vmatpush1.msra.mxu0 %v180
    %203 = vmatprep.subr.mxu0 0.0
    %204 = vmatpush1.msra.mxu0 %v181
    %205 = vmatprep.subr.mxu0 0.0
    %206 = vmatpush1.msra.mxu0 %v182
    %207 = vmatprep.subr.mxu0 0.0
    %208 = vmatpush1.msra.mxu0 %v183
    %209 = vmatprep.subr.mxu0 0.0
    %210 = vmatpush1.msra.mxu0 0.0
    %211 = vmatprep.subr.mxu0 0.0
    %212 = vmatpush1.msra.mxu0 0.0
    %213 = vmatprep.subr.mxu0 0.0
    %214 = vmatpush1.msra.mxu0 0.0
    %215 = vmatprep.subr.mxu0 0.0
    %216 = vmatpush1.msra.mxu0 0.0
    %217 = vmatprep.subr.mxu0 0.0
    %218 = vmatpush1.msra.mxu0 0.0
    %219 = vmatprep.subr.mxu0 0.0
    %220 = vmatpush1.msra.mxu0 0.0
    %221 = vmatprep.subr.mxu0 0.0
    %222 = vmatpush1.msra.mxu0 0.0
    %223 = vmatprep.subr.mxu0 0.0
    %224 = vmatpush1.msra.mxu0 0.0
    %225 = vmatprep.subr.mxu0 0.0
    %226 = vmatpush1.msra.mxu0 0.0
    %227 = vmatprep.subr.mxu0 0.0
    %228 = vmatpush1.msra.mxu0 0.0
    %229 = vmatprep.subr.mxu0 0.0
    %230 = vmatpush1.msra.mxu0 0.0
    %231 = vmatprep.subr.mxu0 0.0
    %232 = vmatpush1.msra.mxu0 0.0
    %233 = vmatprep.subr.mxu0 0.0
    %234 = vmatpush1.msra.mxu0 0.0
    %235 = vmatprep.subr.mxu0 0.0
    %236 = vmatpush1.msra.mxu0 0.0
    %237 = vmatprep.subr.mxu0 0.0
    %238 = vmatpush1.msra.mxu0 0.0
    %239 = vmatprep.subr.mxu0 0.0
    %240 = vmatpush1.msra.mxu0 0.0
    %241 = vmatprep.subr.mxu0 0.0
    %242 = vmatpush1.msra.mxu0 0.0
    %243 = vmatprep.subr.mxu0 0.0
    %244 = vmatpush1.msra.mxu0 0.0
    %245 = vmatprep.subr.mxu0 0.0
    %246 = vmatpush1.msra.mxu0 0.0
    %247 = vmatprep.subr.mxu0 0.0
    %248 = vmatpush1.msra.mxu0 0.0
    %249 = vmatprep.subr.mxu0 0.0
    %250 = vmatpush1.msra.mxu0 0.0
    %251 = vmatprep.subr.mxu0 0.0
    %252 = vmatpush1.msra.mxu0 0.0
    %253 = vmatprep.subr.mxu0 0.0
    %254 = vmatpush1.msra.mxu0 0.0
    %255 = vmatprep.subr.mxu0 0.0
    %256 = vmatpush1.msra.mxu0 0.0
    %257 = vmatprep.subr.mxu0 0.0
    %258 = vmatpush1.msra.mxu0 0.0
    %259 = vmatprep.subr.mxu0 0.0
    %260 = vmatpush1.msra.mxu0 0.0
    %261 = vmatprep.subr.mxu0 0.0
    %262 = vmatpush1.msra.mxu0 0.0
    %263 = vmatprep.subr.mxu0 0.0
    %264 = vmatpush1.msra.mxu0 0.0
    %265 = vmatprep.mubr.f32.mxu0 0.0
    %266 = vmatmul.mubr.f32.gmra.mrb[0].mxu0 %v190
    %v267 = vpop.f32.mrb[0].mxu0
    %v268 = vadd.f32 %v187, %v267
    %v269 = vpop.f32.mrb[0].mxu0
    %270 = vmatprep.mubr.f32.mxu0 0.0
    %271 = vmatmul.mubr.f32.gmra.mrb[0].mxu0 %v193
    %v272 = vpop.f32.mrb[0].mxu0
    %v273 = vadd.f32 %v187, %v272
    %v274 = vpop.f32.mrb[0].mxu0
    %275 = vmatprep.mubr.f32.mxu0 0.0
    %276 = vmatmul.mubr.f32.gmra.mrb[0].mxu0 %v196
    %v277 = vpop.f32.mrb[0].mxu0
    %v278 = vadd.f32 %v187, %v277
    %v279 = vpop.f32.mrb[0].mxu0
    %280 = vmatprep.mubr.f32.mxu0 0.0
    %281 = vmatmul.mubr.f32.gmra.mrb[0].mxu0 %v199
    %v282 = vpop.f32.mrb[0].mxu0
    %v283 = vadd.f32 %v187, %v282
    %v284 = vpop.f32.mrb[0].mxu0
    %285 = vdwg.mxu0
    %v288 = vunpack.c.l.s4 1966171168
    %v289 = vunpack.c.0.s8 %v288
    %v290 = vlaneseq
    %v291 = vshrl.u32 %v290, 7
    %v292 = vsub.s32 %v289, %v291
    %v293 = vrot.slane %v177, %v292
    %v294 = vcombine.high %v293, %v293
    %v296 = vunpack.c.l.s4 1966171168
    %v297 = vunpack.c.0.s8 %v296
    %v298 = vlaneseq
    %v299 = vshrl.u32 %v298, 7
    %v300 = vsub.s32 %v297, %v299
    %v301 = vrot.slane %v293, %v300
    %v303 = vunpack.c.l.s4 1966171168
    %v304 = vunpack.c.0.s8 %v303
    %v305 = vlaneseq
    %v306 = vshrl.u32 %v305, 7
    %v307 = vsub.s32 %v304, %v306
    %v308 = vrot.slane %v294, %v307
    %v309 = vlaneseq
    %v310 = vshrl.u32 %v309, 7
    %v311 = vsub.s32 0, %v310
    %v312 = vrot.slane %v301, %v311
    %v313 = vlaneseq
    %v314 = vshrl.u32 %v313, 7
    %v315 = vsub.s32 0, %v314
    %v316 = vrot.slane %v308, %v315
    %v319 = vmul.f32 %v268, %v312
    %v320 = vmul.f32 %v273, %v312
    %v321 = vmul.f32 %v278, %v316
    %v322 = vmul.f32 %v283, %v316
    %327 = vrot.lane.b32.xlu0 %v319, 112
    %v328 = vpop.permute.xlu0 %327
    %329 = vrot.lane.b32.xlu0 %v320, 112
    %v330 = vpop.permute.xlu0 %329
    %331 = vrot.lane.b32.xlu0 %v321, 112
    %v332 = vpop.permute.xlu0 %331
    %333 = vrot.lane.b32.xlu0 %v322, 112
    %v334 = vpop.permute.xlu0 %333
    %v339 = vadd.f32 %v319, %v328
    %v340 = vadd.f32 %v320, %v330
    %v341 = vadd.f32 %v321, %v332
    %v342 = vadd.f32 %v322, %v334
    %343 = vrot.lane.b32.xlu0 %v319, 96
    %v344 = vpop.permute.xlu0 %343
    %345 = vrot.lane.b32.xlu0 %v320, 96
    %v346 = vpop.permute.xlu0 %345
    %347 = vrot.lane.b32.xlu0 %v321, 96
    %v348 = vpop.permute.xlu0 %347
    %349 = vrot.lane.b32.xlu0 %v322, 96
    %v350 = vpop.permute.xlu0 %349
    %v355 = vadd.f32 %v339, %v344
    %v356 = vadd.f32 %v340, %v346
    %v357 = vadd.f32 %v341, %v348
    %v358 = vadd.f32 %v342, %v350
    %359 = vrot.lane.b32.xlu0 %v319, 80
    %v360 = vpop.permute.xlu0 %359
    %361 = vrot.lane.b32.xlu0 %v320, 80
    %v362 = vpop.permute.xlu0 %361
    %363 = vrot.lane.b32.xlu0 %v321, 80
    %v364 = vpop.permute.xlu0 %363
    %365 = vrot.lane.b32.xlu0 %v322, 80
    %v366 = vpop.permute.xlu0 %365
    %v371 = vadd.f32 %v355, %v360
    %v372 = vadd.f32 %v356, %v362
    %v373 = vadd.f32 %v357, %v364
    %v374 = vadd.f32 %v358, %v366
    %v375 = vmax.f32 %v371, 0.0
    %v376 = vmax.f32 %v372, 0.0
    %v377 = vmax.f32 %v373, 0.0
    %v378 = vmax.f32 %v374, 0.0
    %v379 = vrsqrt.pop %v375
    %v380 = vmul.f32 %v375, %v379
    %vm381 = vcmp.eq.f32.partialorder %v375, inf
    %v382 = vsel %vm381, %v375, %v380
    %vm383 = vcmp.eq.f32.partialorder %v375, 0.0
    %v384 = vand.u32 %v375, 2147483648
    %v385 = vsel %vm383, %v384, %v382
    %v386 = vrsqrt.pop %v376
    %v387 = vmul.f32 %v376, %v386
    %vm388 = vcmp.eq.f32.partialorder %v376, inf
    %v389 = vsel %vm388, %v376, %v387
    %vm390 = vcmp.eq.f32.partialorder %v376, 0.0
    %v391 = vand.u32 %v376, 2147483648
    %v392 = vsel %vm390, %v391, %v389
    %v393 = vrsqrt.pop %v377
    %v394 = vmul.f32 %v377, %v393
    %vm395 = vcmp.eq.f32.partialorder %v377, inf
    %v396 = vsel %vm395, %v377, %v394
    %vm397 = vcmp.eq.f32.partialorder %v377, 0.0
    %v398 = vand.u32 %v377, 2147483648
    %v399 = vsel %vm397, %v398, %v396
    %v400 = vrsqrt.pop %v378
    %v401 = vmul.f32 %v378, %v400
    %vm402 = vcmp.eq.f32.partialorder %v378, inf
    %v403 = vsel %vm402, %v378, %v401
    %vm404 = vcmp.eq.f32.partialorder %v378, 0.0
    %v405 = vand.u32 %v378, 2147483648
    %v406 = vsel %vm404, %v405, %v403
    %v407 = vsub.f32 0.0, %v371
    %v408 = vsub.f32 0.0, %v372
    %v409 = vsub.f32 0.0, %v373
    %v410 = vsub.f32 0.0, %v374
    %v411 = vmax.f32 %v407, 0.0
    %v412 = vmax.f32 %v408, 0.0
    %v413 = vmax.f32 %v409, 0.0
    %v414 = vmax.f32 %v410, 0.0
    %v415 = vrsqrt.pop %v411
    %v416 = vmul.f32 %v411, %v415
    %vm417 = vcmp.eq.f32.partialorder %v411, inf
    %v418 = vsel %vm417, %v411, %v416
    %vm419 = vcmp.eq.f32.partialorder %v411, 0.0
    %v420 = vand.u32 %v411, 2147483648
    %v421 = vsel %vm419, %v420, %v418
    %v422 = vrsqrt.pop %v412
    %v423 = vmul.f32 %v412, %v422
    %vm424 = vcmp.eq.f32.partialorder %v412, inf
    %v425 = vsel %vm424, %v412, %v423
    %vm426 = vcmp.eq.f32.partialorder %v412, 0.0
    %v427 = vand.u32 %v412, 2147483648
    %v428 = vsel %vm426, %v427, %v425
    %v429 = vrsqrt.pop %v413
    %v430 = vmul.f32 %v413, %v429
    %vm431 = vcmp.eq.f32.partialorder %v413, inf
    %v432 = vsel %vm431, %v413, %v430
    %vm433 = vcmp.eq.f32.partialorder %v413, 0.0
    %v434 = vand.u32 %v413, 2147483648
    %v435 = vsel %vm433, %v434, %v432
    %v436 = vrsqrt.pop %v414
    %v437 = vmul.f32 %v414, %v436
    %vm438 = vcmp.eq.f32.partialorder %v414, inf
    %v439 = vsel %vm438, %v414, %v437
    %vm440 = vcmp.eq.f32.partialorder %v414, 0.0
    %v441 = vand.u32 %v414, 2147483648
    %v442 = vsel %vm440, %v441, %v439
    %v443 = vsub.f32 %v385, %v421
    %v444 = vsub.f32 %v392, %v428
    %v445 = vsub.f32 %v399, %v435
    %v446 = vsub.f32 %v406, %v442
    %v447 = vmul.f32 %v443, %v443
    %v448 = vmul.f32 %v444, %v444
    %v449 = vmul.f32 %v445, %v445
    %v450 = vmul.f32 %v446, %v446
    %vm451 = vcmask 130048
    %v452 = vsel %vm451, %v447, 0.0
    %453 = vadd.xlane.f32.xlu0 %v452
    %v454 = vpop.xlane.xlu0 %453
    %v455 = vsel %vm451, %v448, 0.0
    %456 = vadd.xlane.f32.xlu0 %v455
    %v457 = vpop.xlane.xlu0 %456
    %v458 = vsel %vm451, %v449, 0.0
    %459 = vadd.xlane.f32.xlu0 %v458
    %v460 = vpop.xlane.xlu0 %459
    %v461 = vsel %vm451, %v450, 0.0
    %462 = vadd.xlane.f32.xlu0 %v461
    %v463 = vpop.xlane.xlu0 %462
    %v464 = vadd.f32 %v454, %v457
    %v465 = vrot.slane %v464, 4
    %v466 = vadd.f32 %v464, %v465
    %v467 = vrot.slane %v466, 2
    %v468 = vadd.f32 %v466, %v467
    %v469 = vrot.slane %v468, 1
    %v470 = vadd.f32 %v468, %v469
    %v471 = vadd.f32 %v460, %v463
    %v472 = vrot.slane %v471, 4
    %v473 = vadd.f32 %v471, %v472
    %v474 = vrot.slane %v473, 2
    %v475 = vadd.f32 %v473, %v474
    %v476 = vrot.slane %v475, 1
    %v477 = vadd.f32 %v475, %v476
    %v478 = vmax.f32 %v470, 1e-24
    %v479 = vmax.f32 %v477, 1e-24
    %v480 = vrsqrt.pop %v478
    %v481 = vrsqrt.pop %v479
    %v482 = vmul.f32 %v443, %v480
    %v483 = vmul.f32 %v444, %v480
    %v484 = vmul.f32 %v445, %v481
    %v485 = vmul.f32 %v446, %v481
    %v486 = vld [vmem:[%s4] sm:$0xff]
    %v487 = vld [vmem:[%s4 + $0x8] sm:$0xff]
    %v488 = vlaneseq
    %v489 = vshrl.u32 %v488, 7
    %v490 = vsub.s32 0, %v489
    %v491 = vrot.slane %v74, %v490
    %v493 = vsel %vm451, %v482, 0
    %v496 = vsel %vm451, %v483, 0
    %v499 = vsel %vm451, %v484, 0
    %v502 = vsel %vm451, %v485, 0
    %504 = vmatprep.subr.mxu0 0.0
    %505 = vmatpush1.msra.mxu0 %v486
    %506 = vmatprep.subr.mxu0 0.0
    %507 = vmatpush1.msra.mxu0 %v487
    %508 = vmatprep.subr.mxu0 0.0
    %509 = vmatpush1.msra.mxu0 0.0
    %510 = vmatprep.subr.mxu0 0.0
    %511 = vmatpush1.msra.mxu0 0.0
    %512 = vmatprep.subr.mxu0 0.0
    %513 = vmatpush1.msra.mxu0 0.0
    %514 = vmatprep.subr.mxu0 0.0
    %515 = vmatpush1.msra.mxu0 0.0
    %516 = vmatprep.subr.mxu0 0.0
    %517 = vmatpush1.msra.mxu0 0.0
    %518 = vmatprep.subr.mxu0 0.0
    %519 = vmatpush1.msra.mxu0 0.0
    %520 = vmatprep.subr.mxu0 0.0
    %521 = vmatpush1.msra.mxu0 0.0
    %522 = vmatprep.subr.mxu0 0.0
    %523 = vmatpush1.msra.mxu0 0.0
    %524 = vmatprep.subr.mxu0 0.0
    %525 = vmatpush1.msra.mxu0 0.0
    %526 = vmatprep.subr.mxu0 0.0
    %527 = vmatpush1.msra.mxu0 0.0
    %528 = vmatprep.subr.mxu0 0.0
    %529 = vmatpush1.msra.mxu0 0.0
    %530 = vmatprep.subr.mxu0 0.0
    %531 = vmatpush1.msra.mxu0 0.0
    %532 = vmatprep.subr.mxu0 0.0
    %533 = vmatpush1.msra.mxu0 0.0
    %534 = vmatprep.subr.mxu0 0.0
    %535 = vmatpush1.msra.mxu0 0.0
    %536 = vmatprep.subr.mxu0 0.0
    %537 = vmatpush1.msra.mxu0 0.0
    %538 = vmatprep.subr.mxu0 0.0
    %539 = vmatpush1.msra.mxu0 0.0
    %540 = vmatprep.subr.mxu0 0.0
    %541 = vmatpush1.msra.mxu0 0.0
    %542 = vmatprep.subr.mxu0 0.0
    %543 = vmatpush1.msra.mxu0 0.0
    %544 = vmatprep.subr.mxu0 0.0
    %545 = vmatpush1.msra.mxu0 0.0
    %546 = vmatprep.subr.mxu0 0.0
    %547 = vmatpush1.msra.mxu0 0.0
    %548 = vmatprep.subr.mxu0 0.0
    %549 = vmatpush1.msra.mxu0 0.0
    %550 = vmatprep.subr.mxu0 0.0
    %551 = vmatpush1.msra.mxu0 0.0
    %552 = vmatprep.subr.mxu0 0.0
    %553 = vmatpush1.msra.mxu0 0.0
    %554 = vmatprep.subr.mxu0 0.0
    %555 = vmatpush1.msra.mxu0 0.0
    %556 = vmatprep.subr.mxu0 0.0
    %557 = vmatpush1.msra.mxu0 0.0
    %558 = vmatprep.subr.mxu0 0.0
    %559 = vmatpush1.msra.mxu0 0.0
    %560 = vmatprep.subr.mxu0 0.0
    %561 = vmatpush1.msra.mxu0 0.0
    %562 = vmatprep.subr.mxu0 0.0
    %563 = vmatpush1.msra.mxu0 0.0
    %564 = vmatprep.subr.mxu0 0.0
    %565 = vmatpush1.msra.mxu0 0.0
    %566 = vmatprep.subr.mxu0 0.0
    %567 = vmatpush1.msra.mxu0 0.0
    %568 = vmatprep.mubr.f32.mxu0 0.0
    %569 = vmatmul.mubr.f32.gmra.mrb[0].mxu0 %v493
    %v570 = vpop.f32.mrb[0].mxu0
    %v571 = vadd.f32 %v491, %v570
    %v572 = vpop.f32.mrb[0].mxu0
    %573 = vmatprep.mubr.f32.mxu0 0.0
    %574 = vmatmul.mubr.f32.gmra.mrb[0].mxu0 %v496
    %v575 = vpop.f32.mrb[0].mxu0
    %v576 = vadd.f32 %v491, %v575
    %v577 = vpop.f32.mrb[0].mxu0
    %578 = vmatprep.mubr.f32.mxu0 0.0
    %579 = vmatmul.mubr.f32.gmra.mrb[0].mxu0 %v499
    %v580 = vpop.f32.mrb[0].mxu0
    %v581 = vadd.f32 %v491, %v580
    %v582 = vpop.f32.mrb[0].mxu0
    %583 = vmatprep.mubr.f32.mxu0 0.0
    %584 = vmatmul.mubr.f32.gmra.mrb[0].mxu0 %v502
    %v585 = vpop.f32.mrb[0].mxu0
    %v586 = vadd.f32 %v491, %v585
    %v587 = vpop.f32.mrb[0].mxu0
    %588 = vdwg.mxu0
    %v589 = vmax.f32 %v571, 0.0
    %v590 = vmax.f32 %v576, 0.0
    %v591 = vmax.f32 %v581, 0.0
    %v592 = vmax.f32 %v586, 0.0
    %v593 = vld [vmem:[%s5] sm:$0xff]
    %v594 = vld [vmem:[%s5 + $0x8] sm:$0xff]
    %v595 = vld [vmem:[%s5 + $0x10] sm:$0xff]
    %v596 = vld [vmem:[%s5 + $0x18] sm:$0xff]
    %v597 = vlaneseq
    %v598 = vshrl.u32 %v597, 7
    %v599 = vsub.s32 0, %v598
    %v600 = vrot.slane %v75, %v599
    %v602 = vsel %vm188, %v589, 0
    %v605 = vsel %vm188, %v590, 0
    %v608 = vsel %vm188, %v591, 0
    %v611 = vsel %vm188, %v592, 0
    %613 = vmatprep.subr.mxu0 0.0
    %614 = vmatpush1.msra.mxu0 %v593
    %615 = vmatprep.subr.mxu0 0.0
    %616 = vmatpush1.msra.mxu0 %v594
    %617 = vmatprep.subr.mxu0 0.0
    %618 = vmatpush1.msra.mxu0 %v595
    %619 = vmatprep.subr.mxu0 0.0
    %620 = vmatpush1.msra.mxu0 %v596
    %621 = vmatprep.subr.mxu0 0.0
    %622 = vmatpush1.msra.mxu0 0.0
    %623 = vmatprep.subr.mxu0 0.0
    %624 = vmatpush1.msra.mxu0 0.0
    %625 = vmatprep.subr.mxu0 0.0
    %626 = vmatpush1.msra.mxu0 0.0
    %627 = vmatprep.subr.mxu0 0.0
    %628 = vmatpush1.msra.mxu0 0.0
    %629 = vmatprep.subr.mxu0 0.0
    %630 = vmatpush1.msra.mxu0 0.0
    %631 = vmatprep.subr.mxu0 0.0
    %632 = vmatpush1.msra.mxu0 0.0
    %633 = vmatprep.subr.mxu0 0.0
    %634 = vmatpush1.msra.mxu0 0.0
    %635 = vmatprep.subr.mxu0 0.0
    %636 = vmatpush1.msra.mxu0 0.0
    %637 = vmatprep.subr.mxu0 0.0
    %638 = vmatpush1.msra.mxu0 0.0
    %639 = vmatprep.subr.mxu0 0.0
    %640 = vmatpush1.msra.mxu0 0.0
    %641 = vmatprep.subr.mxu0 0.0
    %642 = vmatpush1.msra.mxu0 0.0
    %643 = vmatprep.subr.mxu0 0.0
    %644 = vmatpush1.msra.mxu0 0.0
    %645 = vmatprep.subr.mxu0 0.0
    %646 = vmatpush1.msra.mxu0 0.0
    %647 = vmatprep.subr.mxu0 0.0
    %648 = vmatpush1.msra.mxu0 0.0
    %649 = vmatprep.subr.mxu0 0.0
    %650 = vmatpush1.msra.mxu0 0.0
    %651 = vmatprep.subr.mxu0 0.0
    %652 = vmatpush1.msra.mxu0 0.0
    %653 = vmatprep.subr.mxu0 0.0
    %654 = vmatpush1.msra.mxu0 0.0
    %655 = vmatprep.subr.mxu0 0.0
    %656 = vmatpush1.msra.mxu0 0.0
    %657 = vmatprep.subr.mxu0 0.0
    %658 = vmatpush1.msra.mxu0 0.0
    %659 = vmatprep.subr.mxu0 0.0
    %660 = vmatpush1.msra.mxu0 0.0
    %661 = vmatprep.subr.mxu0 0.0
    %662 = vmatpush1.msra.mxu0 0.0
    %663 = vmatprep.subr.mxu0 0.0
    %664 = vmatpush1.msra.mxu0 0.0
    %665 = vmatprep.subr.mxu0 0.0
    %666 = vmatpush1.msra.mxu0 0.0
    %667 = vmatprep.subr.mxu0 0.0
    %668 = vmatpush1.msra.mxu0 0.0
    %669 = vmatprep.subr.mxu0 0.0
    %670 = vmatpush1.msra.mxu0 0.0
    %671 = vmatprep.subr.mxu0 0.0
    %672 = vmatpush1.msra.mxu0 0.0
    %673 = vmatprep.subr.mxu0 0.0
    %674 = vmatpush1.msra.mxu0 0.0
    %675 = vmatprep.subr.mxu0 0.0
    %676 = vmatpush1.msra.mxu0 0.0
    %677 = vmatprep.mubr.f32.mxu0 0.0
    %678 = vmatmul.mubr.f32.gmra.mrb[0].mxu0 %v602
    %v679 = vpop.f32.mrb[0].mxu0
    %v680 = vadd.f32 %v600, %v679
    %v681 = vpop.f32.mrb[0].mxu0
    %682 = vmatprep.mubr.f32.mxu0 0.0
    %683 = vmatmul.mubr.f32.gmra.mrb[0].mxu0 %v605
    %v684 = vpop.f32.mrb[0].mxu0
    %v685 = vadd.f32 %v600, %v684
    %v686 = vpop.f32.mrb[0].mxu0
    %687 = vmatprep.mubr.f32.mxu0 0.0
    %688 = vmatmul.mubr.f32.gmra.mrb[0].mxu0 %v608
    %v689 = vpop.f32.mrb[0].mxu0
    %v690 = vadd.f32 %v600, %v689
    %v691 = vpop.f32.mrb[0].mxu0
    %692 = vmatprep.mubr.f32.mxu0 0.0
    %693 = vmatmul.mubr.f32.gmra.mrb[0].mxu0 %v611
    %v694 = vpop.f32.mrb[0].mxu0
    %v695 = vadd.f32 %v600, %v694
    %v696 = vpop.f32.mrb[0].mxu0
    %697 = vdwg.mxu0
    %698 = vxpose.xlu0.b32.start [1/16] %v680, 128
    %699 = vxpose.xlu0.b32.cont [2/16] %v685, 128
    %700 = vxpose.xlu0.b32.cont [3/16] 0.0, 128
    %701 = vxpose.xlu0.b32.cont [4/16] 0.0, 128
    %702 = vxpose.xlu0.b32.cont [5/16] 0.0, 128
    %703 = vxpose.xlu0.b32.cont [6/16] 0.0, 128
    %704 = vxpose.xlu0.b32.cont [7/16] 0.0, 128
    %705 = vxpose.xlu0.b32.cont [8/16] 0.0, 128
    %706 = vxpose.xlu0.b32.cont [9/16] 0.0, 128
    %707 = vxpose.xlu0.b32.cont [10/16] 0.0, 128
    %708 = vxpose.xlu0.b32.cont [11/16] 0.0, 128
    %709 = vxpose.xlu0.b32.cont [12/16] 0.0, 128
    %710 = vxpose.xlu0.b32.cont [13/16] 0.0, 128
    %711 = vxpose.xlu0.b32.cont [14/16] 0.0, 128
    %712 = vxpose.xlu0.b32.cont [15/16] 0.0, 128
    %713 = vxpose.xlu0.b32.end [16/16] 0.0, 128
    %v714 = vpop.trf.xlu0
    %v715 = vpop.trf.xlu0
    %v716 = vpop.trf.xlu0
    %v717 = vpop.trf.xlu0
    %v718 = vpop.trf.xlu0
    %v719 = vpop.trf.xlu0
    %v720 = vpop.trf.xlu0
    %v721 = vpop.trf.xlu0
    %v722 = vpop.trf.xlu0
    %v723 = vpop.trf.xlu0
    %v724 = vpop.trf.xlu0
    %v725 = vpop.trf.xlu0
    %v726 = vpop.trf.xlu0
    %v727 = vpop.trf.xlu0
    %v728 = vpop.trf.xlu0
    %v729 = vpop.trf.xlu0
    %730 = vxpose.xlu0.b32.start [1/16] %v690, 128
    %731 = vxpose.xlu0.b32.cont [2/16] %v695, 128
    %732 = vxpose.xlu0.b32.cont [3/16] 0.0, 128
    %733 = vxpose.xlu0.b32.cont [4/16] 0.0, 128
    %734 = vxpose.xlu0.b32.cont [5/16] 0.0, 128
    %735 = vxpose.xlu0.b32.cont [6/16] 0.0, 128
    %736 = vxpose.xlu0.b32.cont [7/16] 0.0, 128
    %737 = vxpose.xlu0.b32.cont [8/16] 0.0, 128
    %738 = vxpose.xlu0.b32.cont [9/16] 0.0, 128
    %739 = vxpose.xlu0.b32.cont [10/16] 0.0, 128
    %740 = vxpose.xlu0.b32.cont [11/16] 0.0, 128
    %741 = vxpose.xlu0.b32.cont [12/16] 0.0, 128
    %742 = vxpose.xlu0.b32.cont [13/16] 0.0, 128
    %743 = vxpose.xlu0.b32.cont [14/16] 0.0, 128
    %744 = vxpose.xlu0.b32.cont [15/16] 0.0, 128
    %745 = vxpose.xlu0.b32.end [16/16] 0.0, 128
    %v746 = vpop.trf.xlu0
    %v747 = vpop.trf.xlu0
    %v748 = vpop.trf.xlu0
    %v749 = vpop.trf.xlu0
    %v750 = vpop.trf.xlu0
    %v751 = vpop.trf.xlu0
    %v752 = vpop.trf.xlu0
    %v753 = vpop.trf.xlu0
    %v754 = vpop.trf.xlu0
    %v755 = vpop.trf.xlu0
    %v756 = vpop.trf.xlu0
    %v757 = vpop.trf.xlu0
    %v758 = vpop.trf.xlu0
    %v759 = vpop.trf.xlu0
    %v760 = vpop.trf.xlu0
    %v761 = vpop.trf.xlu0
    %vm762 = vcmask 123904
    %v763 = vsel %vm762, %v714, -inf
    %764 = vmax.xlane.f32.xlu0 %v763
    %v765 = vpop.xlane.xlu0 %764
    %v766 = vsel %vm762, %v746, -inf
    %767 = vmax.xlane.f32.xlu0 %v766
    %v768 = vpop.xlane.xlu0 %767
    %v769 = vsub.f32 %v714, %v765
    %v770 = vsub.f32 %v746, %v768
    %v771 = vmul.f32 %v769, 1.442695
    %v772 = vpow.pop %v771
    %v773 = vmul.f32 %v770, 1.442695
    %v774 = vpow.pop %v773
    %v775 = vsel %vm762, %v772, 0.0
    %776 = vadd.xlane.f32.xlu0 %v775
    %v777 = vpop.xlane.xlu0 %776
    %v778 = vsel %vm762, %v774, 0.0
    %779 = vadd.xlane.f32.xlu0 %v778
    %v780 = vpop.xlane.xlu0 %779
    %v781 = vrcp.pop %v777
    %v782 = vmul.f32 %v772, %v781
    %v783 = vrcp.pop %v780
    %v784 = vmul.f32 %v774, %v783
    %v786 = vsel %vm451, %v782, 0
    %788 = vmatprep.subr.mxu0 0.0
    %789 = vmatpush1.msra.mxu0 %v68
    %790 = vmatprep.subr.mxu0 0.0
    %791 = vmatpush1.msra.mxu0 %v69
    %792 = vmatprep.subr.mxu0 0.0
    %793 = vmatpush1.msra.mxu0 0.0
    %794 = vmatprep.subr.mxu0 0.0
    %795 = vmatpush1.msra.mxu0 0.0
    %796 = vmatprep.subr.mxu0 0.0
    %797 = vmatpush1.msra.mxu0 0.0
    %798 = vmatprep.subr.mxu0 0.0
    %799 = vmatpush1.msra.mxu0 0.0
    %800 = vmatprep.subr.mxu0 0.0
    %801 = vmatpush1.msra.mxu0 0.0
    %802 = vmatprep.subr.mxu0 0.0
    %803 = vmatpush1.msra.mxu0 0.0
    %804 = vmatprep.subr.mxu0 0.0
    %805 = vmatpush1.msra.mxu0 0.0
    %806 = vmatprep.subr.mxu0 0.0
    %807 = vmatpush1.msra.mxu0 0.0
    %808 = vmatprep.subr.mxu0 0.0
    %809 = vmatpush1.msra.mxu0 0.0
    %810 = vmatprep.subr.mxu0 0.0
    %811 = vmatpush1.msra.mxu0 0.0
    %812 = vmatprep.subr.mxu0 0.0
    %813 = vmatpush1.msra.mxu0 0.0
    %814 = vmatprep.subr.mxu0 0.0
    %815 = vmatpush1.msra.mxu0 0.0
    %816 = vmatprep.subr.mxu0 0.0
    %817 = vmatpush1.msra.mxu0 0.0
    %818 = vmatprep.subr.mxu0 0.0
    %819 = vmatpush1.msra.mxu0 0.0
    %820 = vmatprep.subr.mxu0 0.0
    %821 = vmatpush1.msra.mxu0 0.0
    %822 = vmatprep.subr.mxu0 0.0
    %823 = vmatpush1.msra.mxu0 0.0
    %824 = vmatprep.subr.mxu0 0.0
    %825 = vmatpush1.msra.mxu0 0.0
    %826 = vmatprep.subr.mxu0 0.0
    %827 = vmatpush1.msra.mxu0 0.0
    %828 = vmatprep.subr.mxu0 0.0
    %829 = vmatpush1.msra.mxu0 0.0
    %830 = vmatprep.subr.mxu0 0.0
    %831 = vmatpush1.msra.mxu0 0.0
    %832 = vmatprep.subr.mxu0 0.0
    %833 = vmatpush1.msra.mxu0 0.0
    %834 = vmatprep.subr.mxu0 0.0
    %835 = vmatpush1.msra.mxu0 0.0
    %836 = vmatprep.subr.mxu0 0.0
    %837 = vmatpush1.msra.mxu0 0.0
    %838 = vmatprep.subr.mxu0 0.0
    %839 = vmatpush1.msra.mxu0 0.0
    %840 = vmatprep.subr.mxu0 0.0
    %841 = vmatpush1.msra.mxu0 0.0
    %842 = vmatprep.subr.mxu0 0.0
    %843 = vmatpush1.msra.mxu0 0.0
    %844 = vmatprep.subr.mxu0 0.0
    %845 = vmatpush1.msra.mxu0 0.0
    %846 = vmatprep.subr.mxu0 0.0
    %847 = vmatpush1.msra.mxu0 0.0
    %848 = vmatprep.subr.mxu0 0.0
    %849 = vmatpush1.msra.mxu0 0.0
    %850 = vmatprep.subr.mxu0 0.0
    %851 = vmatpush1.msra.mxu0 0.0
    %852 = vmatprep.mubr.f32.mxu0 0.0
    %853 = vmatmul.mubr.f32.gmra.mrb[0].mxu0 %v786
    %v854 = vpop.f32.mrb[0].mxu0
    %v855 = vadd.f32 0.0, %v854
    %v856 = vpop.f32.mrb[0].mxu0
    %857 = vdwg.mxu0
    %v859 = vsel %vm451, %v784, 0
    %861 = vmatprep.subr.mxu0 0.0
    %862 = vmatpush1.msra.mxu0 %v70
    %863 = vmatprep.subr.mxu0 0.0
    %864 = vmatpush1.msra.mxu0 %v71
    %865 = vmatprep.subr.mxu0 0.0
    %866 = vmatpush1.msra.mxu0 0.0
    %867 = vmatprep.subr.mxu0 0.0
    %868 = vmatpush1.msra.mxu0 0.0
    %869 = vmatprep.subr.mxu0 0.0
    %870 = vmatpush1.msra.mxu0 0.0
    %871 = vmatprep.subr.mxu0 0.0
    %872 = vmatpush1.msra.mxu0 0.0
    %873 = vmatprep.subr.mxu0 0.0
    %874 = vmatpush1.msra.mxu0 0.0
    %875 = vmatprep.subr.mxu0 0.0
    %876 = vmatpush1.msra.mxu0 0.0
    %877 = vmatprep.subr.mxu0 0.0
    %878 = vmatpush1.msra.mxu0 0.0
    %879 = vmatprep.subr.mxu0 0.0
    %880 = vmatpush1.msra.mxu0 0.0
    %881 = vmatprep.subr.mxu0 0.0
    %882 = vmatpush1.msra.mxu0 0.0
    %883 = vmatprep.subr.mxu0 0.0
    %884 = vmatpush1.msra.mxu0 0.0
    %885 = vmatprep.subr.mxu0 0.0
    %886 = vmatpush1.msra.mxu0 0.0
    %887 = vmatprep.subr.mxu0 0.0
    %888 = vmatpush1.msra.mxu0 0.0
    %889 = vmatprep.subr.mxu0 0.0
    %890 = vmatpush1.msra.mxu0 0.0
    %891 = vmatprep.subr.mxu0 0.0
    %892 = vmatpush1.msra.mxu0 0.0
    %893 = vmatprep.subr.mxu0 0.0
    %894 = vmatpush1.msra.mxu0 0.0
    %895 = vmatprep.subr.mxu0 0.0
    %896 = vmatpush1.msra.mxu0 0.0
    %897 = vmatprep.subr.mxu0 0.0
    %898 = vmatpush1.msra.mxu0 0.0
    %899 = vmatprep.subr.mxu0 0.0
    %900 = vmatpush1.msra.mxu0 0.0
    %901 = vmatprep.subr.mxu0 0.0
    %902 = vmatpush1.msra.mxu0 0.0
    %903 = vmatprep.subr.mxu0 0.0
    %904 = vmatpush1.msra.mxu0 0.0
    %905 = vmatprep.subr.mxu0 0.0
    %906 = vmatpush1.msra.mxu0 0.0
    %907 = vmatprep.subr.mxu0 0.0
    %908 = vmatpush1.msra.mxu0 0.0
    %909 = vmatprep.subr.mxu0 0.0
    %910 = vmatpush1.msra.mxu0 0.0
    %911 = vmatprep.subr.mxu0 0.0
    %912 = vmatpush1.msra.mxu0 0.0
    %913 = vmatprep.subr.mxu0 0.0
    %914 = vmatpush1.msra.mxu0 0.0
    %915 = vmatprep.subr.mxu0 0.0
    %916 = vmatpush1.msra.mxu0 0.0
    %917 = vmatprep.subr.mxu0 0.0
    %918 = vmatpush1.msra.mxu0 0.0
    %919 = vmatprep.subr.mxu0 0.0
    %920 = vmatpush1.msra.mxu0 0.0
    %921 = vmatprep.subr.mxu0 0.0
    %922 = vmatpush1.msra.mxu0 0.0
    %923 = vmatprep.subr.mxu0 0.0
    %924 = vmatpush1.msra.mxu0 0.0
    %925 = vmatprep.mubr.f32.mxu0 0.0
    %926 = vmatmul.mubr.f32.gmra.mrb[0].mxu0 %v859
    %v927 = vpop.f32.mrb[0].mxu0
    %v928 = vadd.f32 0.0, %v927
    %v929 = vpop.f32.mrb[0].mxu0
    %930 = vdwg.mxu0
    %vm931 = vcmask 254976
    %932 = vst.msk [vmem:[#allocation8] sm:$0x3] %vm931, %v855
    %933 = vst.msk [vmem:[#allocation8 + $0x2] sm:$0x3] %vm931, %v928
    // Predicated region
    $region42: #{tpu_custom_call.1} parent=1 // pred_check
      _
    $region43: #{tpu_custom_call.1} parent=1 // pred_check_branch
      %935 = sbr.rel (0) target = $region45
    $region44: #{tpu_custom_call.1} parent=1 // pred_region
      %s937 = ssub.s32 64, 64
      %938 = vsyncadd [#allocation4], %s937
      %s939 = sshll.u32 [#allocation8], 4
      %s940 = int_to_ptr.vmem [resolvable:$true] %s939
      %945 = dma.vmem_to_hbm [thread:$0]  %s940, 64, %s7, [#allocation4], 32, 32, 2
    $region45: #{tpu_custom_call.1} parent=1 // pred_fallthru
      _
    // Predicated region
    $region46: #{tpu_custom_call.1} parent=1 // pred_check
      _
    $region47: #{tpu_custom_call.1} parent=1 // pred_check_branch
      %947 = sbr.rel (0) target = $region49
    $region48: #{tpu_custom_call.1} parent=1 // pred_region
      %948 = dma.done [#allocation4], 64
    $region49: #{tpu_custom_call.1} parent=1 // pred_fallthru
      _
    %949 = vsyncpa [#allocation3], 1
    %950 = vsyncpa [#allocation6], 1
    %951 = vsyncpa [#allocation4], 1

</llo_original>
